<compile_context>
chip_gen: v7x
topology: tpu7x:2x2x1
jax: 0.10.0
libtpu: 0.0.40
codegen_flags: <defaults>
</compile_context>

<pallas_src>
import functools
import math

import jax
import jax.numpy as jnp
from jax import lax
from jax.experimental import pallas as pl
from jax.experimental.pallas import tpu as pltpu

TOKEN_ATTEND_SELF_VALUE = -0.0005
_NORM_EPS = 1e-12                               # F.normalize default eps
_F32_MAX = float(jnp.finfo(jnp.float32).max)    # masked_fill value for non-local


def _consensus_attn_kernel(*refs, scale, attend_self, has_nonlocal_mask,
                           n, l, d, b_tile, q_tile):
    if has_nonlocal_mask:
        q_ref, kv_ref, mask_ref, o_ref = refs
    else:
        q_ref, kv_ref, o_ref = refs
        mask_ref = None

    # ---- masks hoisted out of the unrolled (b_tile x l) loops ------------
    self_mask = None
    if not attend_self:
        qi = pl.program_id(1)
        row = lax.broadcasted_iota(jnp.int32, (q_tile, n), 0) + qi * q_tile
        col = lax.broadcasted_iota(jnp.int32, (q_tile, n), 1)
        self_mask = row == col                                   # (q_tile, n)
    nonlocal_mask = None
    if mask_ref is not None:
        nonlocal_mask = mask_ref[...] > jnp.float32(0.5)         # (q_tile, n)

    for bi in range(b_tile):            # static unroll; b_tile and l are small
        for li in range(l):
            q_l = q_ref[bi, :, li * d:(li + 1) * d]              # (q_tile, d)
            kv_l = kv_ref[bi, :, li * d:(li + 1) * d]            # (n, d)
            kvf = kv_l.astype(jnp.float32)

            # k = L2-normalize(kv) over d with the d**-0.5 attention scale
            # folded into the per-row factor (no (q, n) scaling later).
            # NOTE: recomputed per q-tile when n is tiled; cheap (n*d work).
            ssq = jnp.sum(kvf * kvf, axis=-1, keepdims=True)     # (n, 1)
            inv = lax.rsqrt(jnp.maximum(ssq, jnp.float32(_NORM_EPS * _NORM_EPS)))
            k_l = (kvf * (inv * jnp.float32(scale))).astype(kv_l.dtype)

            # sim[i, j] = <q_i, scale * k_j>; contract last dims (no .T).
            sim = lax.dot_general(
                q_l, k_l, (((1,), (1,)), ((), ())),
                preferred_element_type=jnp.float32)              # (q_tile, n)

            if self_mask is not None:
                sim = jnp.where(self_mask,
                                jnp.float32(TOKEN_ATTEND_SELF_VALUE), sim)
            if nonlocal_mask is not None:
                sim = jnp.where(nonlocal_mask, jnp.float32(-_F32_MAX), sim)

            # Softmax with the denominator folded into the output:
            #   out = (exp(sim - max) @ v) * 1/rowsum
            # (saves a (q_tile, n) multiply; denom >= 1 so approx rcp is safe)
            sim = sim - jnp.max(sim, axis=-1, keepdims=True)
            p = jnp.exp(sim)
            denom = jnp.sum(p, axis=-1, keepdims=True)           # (q_tile, 1)
            out_l = jnp.dot(p.astype(kv_l.dtype), kv_l,
                            preferred_element_type=jnp.float32)  # (q_tile, d)
            out_l = out_l * pl.reciprocal(denom, approx=True)

            # Per-level direct store into the lane-dense output slab.
            o_ref[bi, :, li * d:(li + 1) * d] = out_l.astype(o_ref.dtype)


def _largest_divisor(x, cap, multiple_of=1):
    best = None
    for c in range(1, x + 1):
        if x % c == 0 and c <= cap and c % multiple_of == 0:
            best = c
    return best


def _nonlocal_mask(side, radius):
    ii, jj = jnp.meshgrid(jnp.arange(side), jnp.arange(side), indexing="ij")
    coors = jnp.stack([ii, jj], axis=-1).reshape(side * side, 2).astype(jnp.float32)
    dist = jnp.sqrt(jnp.sum((coors[:, None, :] - coors[None, :, :]) ** 2, axis=-1))
    return dist > float(radius)                                  # (n, n) bool


def consensus_attention(levels, attend_self=True, local_consensus_radius=0,
                        num_patches_side=None):
    """levels: (b, n, l, d) -> (b, n, l, d), matching the PyTorch module."""
    b, n, l, d = levels.shape
    dtype = levels.dtype
    itemsize = jnp.dtype(dtype).itemsize
    x = levels.reshape(b, n, l * d)      # contiguous reshape: free

    # ---- non-local (distance) mask, as in the PyTorch buffer --------------
    has_mask = local_consensus_radius > 0
    mask_f = None
    if has_mask:
        side = (num_patches_side if num_patches_side is not None
                else int(round(math.sqrt(n))))
        assert side * side == n, "local_consensus_radius>0 requires n == side**2"
        mask_f = _nonlocal_mask(side, local_consensus_radius).astype(jnp.float32)

    # ---- tiling ------------------------------------------------------------
    # Query tile bounds the f32 sim to (q_tile, n) -- exact softmax (keys are
    # never tiled), VMEM-safe on v7x for large n.
    # TODO(synk): for extremely large n where even a (q_tile, n) f32 sim or the
    # resident (n, l*d) k/v slab exceeds VMEM, add a key-tile axis with
    # flash-style online softmax.
    MAX_Q_TILE = 512
    if n <= MAX_Q_TILE:
        q_tile = n
    else:
        q_tile = _largest_divisor(n, MAX_Q_TILE, multiple_of=8) or n

    def vmem_bytes(bt):
        q_slab = bt * q_tile * l * d * itemsize
        kv_slab = bt * n * l * d * itemsize
        io = 2 * (2 * q_slab + kv_slab)                 # double-buffered q/out/kv
        mask_b = 2 * q_tile * n * 4 if has_mask else 0
        work = 3 * q_tile * n * 4 + 4 * (n + q_tile) * d * 4
        return io + mask_b + work

    budget = 20 << 20
    b_tile = 1
    for cand in range(1, b + 1):
        if b % cand == 0 and vmem_bytes(cand) <= budget:
            b_tile = cand
    # Explicit scoped-VMEM limit with headroom (v5e default is only 16 MiB);
    # capped below v7x's 64 MiB physical VMEM.
    vmem_limit = int(min(max(2 * vmem_bytes(b_tile), 32 << 20), 56 << 20))

    kernel = functools.partial(
        _consensus_attn_kernel,
        scale=float(d) ** -0.5,
        attend_self=attend_self,
        has_nonlocal_mask=has_mask,
        n=n, l=l, d=d, b_tile=b_tile, q_tile=q_tile,
    )

    in_specs = [
        pl.BlockSpec((b_tile, q_tile, l * d), lambda bi, qi: (bi, qi, 0)),  # q view
        pl.BlockSpec((b_tile, n, l * d), lambda bi, qi: (bi, 0, 0)),        # k/v slab
    ]
    operands = [x, x]
    if has_mask:
        in_specs.append(pl.BlockSpec((q_tile, n), lambda bi, qi: (qi, 0)))
        operands.append(mask_f)

    cost = pl.CostEstimate(
        flops=4 * b * l * n * n * d,                  # two matmuls per (batch, level)
        transcendentals=b * l * n * (n + 2),          # exp + rsqrt + rcp
        bytes_accessed=3 * b * n * l * d * itemsize,  # q view + kv slab + out
    )

    out = pl.pallas_call(
        kernel,
        out_shape=jax.ShapeDtypeStruct((b, n, l * d), dtype),
        grid=(b // b_tile, n // q_tile),
        in_specs=in_specs,
        out_specs=pl.BlockSpec((b_tile, q_tile, l * d), lambda bi, qi: (bi, qi, 0)),
        compiler_params=pltpu.CompilerParams(
            dimension_semantics=("parallel", "parallel"),
            vmem_limit_bytes=vmem_limit),
        cost_estimate=cost,
    )(*operands)

    return out.reshape(b, n, l, d)


def _reference(levels, attend_self=True, local_consensus_radius=0,
               num_patches_side=None):
    """Pure-JAX reference mirroring the PyTorch forward."""
    b, n, l, d = levels.shape
    q = levels
    norm = jnp.sqrt(jnp.sum(levels * levels, axis=-1, keepdims=True))
    k = levels / jnp.maximum(norm, _NORM_EPS)
    sim = jnp.einsum('bild,bjld->blij', q, k) * float(d) ** -0.5
    if not attend_self:
        eye = jnp.eye(n, dtype=bool)[None, None]
        sim = jnp.where(eye, TOKEN_ATTEND_SELF_VALUE, sim)
    if local_consensus_radius > 0:
        mask = _nonlocal_mask(num_patches_side, local_consensus_radius)
        sim = jnp.where(mask[None, None], -_F32_MAX, sim)
    attn = jax.nn.softmax(sim, axis=-1)
    return jnp.einsum('blij,bjld->bild', attn, levels)


if __name__ == "__main__":
    key = jax.random.PRNGKey(0)
    b, n, l, d = 2, 16, 4, 32            # n = 4x4 patch grid
    levels = jax.random.normal(key, (b, n, l, d), dtype=jnp.float32)

    configs = [
        dict(attend_self=True, local_consensus_radius=0),
        dict(attend_self=False, local_consensus_radius=0),
        dict(attend_self=False, local_consensus_radius=2),
    ]
    for cfg in configs:
        out = consensus_attention(levels, num_patches_side=4, **cfg)
        out = jax.block_until_ready(out)
        ref = _reference(levels, num_patches_side=4, **cfg)
        assert out.shape == (b, n, l, d)
        max_err = jnp.max(jnp.abs(out - ref))
        # tolerance loosened vs exact-divide because of pl.reciprocal(approx=True)
        assert jnp.allclose(out, ref, atol=2e-3, rtol=2e-3), (
            f"{cfg}: max abs diff {max_err}")
    print("KERNEL_OK")
</pallas_src>

<mosaic_0001>
module attributes {stable_mosaic.version = 11 : i64} {
  func.func @_consensus_attn_kernel(%arg0: i32, %arg1: i32, %arg2: memref<2x16x128xf32, #tpu.memory_space<vmem>>, %arg3: memref<2x16x128xf32, #tpu.memory_space<vmem>>, %arg4: memref<2x16x128xf32, #tpu.memory_space<vmem>>) attributes {dimension_semantics = [#tpu.dimension_semantics<parallel>, #tpu.dimension_semantics<parallel>], iteration_bounds = array<i64: 1, 1>, scalar_prefetch = 0 : i64, scratch_operands = 0 : i64, tpu.core_type = #tpu.core_type<tc>, window_params = [{transform_indices = @transform_0, window_bounds = array<i64: 2, 16, 128>}, {transform_indices = @transform_1, window_bounds = array<i64: 2, 16, 128>}, {transform_indices = @transform_2, window_bounds = array<i64: 2, 16, 128>}]} {
    %c0 = arith.constant 0 : index
    %c0_0 = arith.constant 0 : index
    %c0_1 = arith.constant 0 : index
    %0 = vector.load %arg2[%c0, %c0_0, %c0_1] : memref<2x16x128xf32, #tpu.memory_space<vmem>>, vector<1x16x32xf32>
    %1 = vector.shape_cast %0 : vector<1x16x32xf32> to vector<16x32xf32>
    %c0_2 = arith.constant 0 : index
    %c0_3 = arith.constant 0 : index
    %c0_4 = arith.constant 0 : index
    %2 = vector.load %arg3[%c0_2, %c0_3, %c0_4] : memref<2x16x128xf32, #tpu.memory_space<vmem>>, vector<1x16x32xf32>
    %3 = vector.shape_cast %2 : vector<1x16x32xf32> to vector<16x32xf32>
    %4 = arith.mulf %3, %3 : vector<16x32xf32>
    %cst = arith.constant dense<0.000000e+00> : vector<16xf32>
    %5 = vector.multi_reduction <add>, %4, %cst [1] : vector<16x32xf32> to vector<16xf32>
    %6 = vector.shape_cast %5 : vector<16xf32> to vector<16x1xf32>
    %cst_5 = arith.constant 1.000000e-24 : f32
    %7 = vector.broadcast %cst_5 : f32 to vector<16x1xf32>
    %8 = arith.maximumf %6, %7 : vector<16x1xf32>
    %9 = math.rsqrt %8 : vector<16x1xf32>
    %cst_6 = arith.constant 0.176776692 : f32
    %10 = vector.broadcast %cst_6 : f32 to vector<16x1xf32>
    %11 = arith.mulf %9, %10 : vector<16x1xf32>
    %12 = vector.broadcast %11 : vector<16x1xf32> to vector<16x32xf32>
    %13 = arith.mulf %3, %12 : vector<16x32xf32>
    %cst_7 = arith.constant dense<0.000000e+00> : vector<16x16xf32>
    %14 = tpu.matmul %1, %13, %cst_7 {dimension_numbers = #tpu.dot_dimension_numbers<[1], [1], [0], [0], [0, 0, 1, 0], [], []>} : vector<16x32xf32>, vector<16x32xf32>, vector<16x16xf32> -> vector<16x16xf32>
    %cst_8 = arith.constant dense<0xFF800000> : vector<16xf32>
    %15 = vector.multi_reduction <maximumf>, %14, %cst_8 [1] : vector<16x16xf32> to vector<16xf32>
    %16 = vector.shape_cast %15 : vector<16xf32> to vector<16x1xf32>
    %17 = vector.broadcast %16 : vector<16x1xf32> to vector<16x16xf32>
    %18 = arith.subf %14, %17 : vector<16x16xf32>
    %19 = math.exp %18 : vector<16x16xf32>
    %cst_9 = arith.constant dense<0.000000e+00> : vector<16xf32>
    %20 = vector.multi_reduction <add>, %19, %cst_9 [1] : vector<16x16xf32> to vector<16xf32>
    %21 = vector.shape_cast %20 : vector<16xf32> to vector<16x1xf32>
    %cst_10 = arith.constant dense<0.000000e+00> : vector<16x32xf32>
    %22 = tpu.matmul %19, %3, %cst_10 {dimension_numbers = #tpu.dot_dimension_numbers<[1], [0], [0], [1], [0, 0, 1, 1], [], []>} : vector<16x16xf32>, vector<16x32xf32>, vector<16x32xf32> -> vector<16x32xf32>
    %23 = tpu.reciprocal %21 {approx = true} : vector<16x1xf32> -> vector<16x1xf32>
    %24 = vector.broadcast %23 : vector<16x1xf32> to vector<16x32xf32>
    %25 = arith.mulf %22, %24 : vector<16x32xf32>
    %c0_11 = arith.constant 0 : index
    %c0_12 = arith.constant 0 : index
    %c0_13 = arith.constant 0 : index
    %26 = vector.load %arg4[%c0_11, %c0_12, %c0_13] : memref<2x16x128xf32, #tpu.memory_space<vmem>>, vector<1x16x32xf32>
    %27 = vector.shape_cast %26 : vector<1x16x32xf32> to vector<16x32xf32>
    %28 = vector.shape_cast %25 : vector<16x32xf32> to vector<1x16x32xf32>
    tpu.vector_store %arg4[%c0_11, %c0_12, %c0_13], %28 {strides = array<i32>} : memref<2x16x128xf32, #tpu.memory_space<vmem>>, vector<1x16x32xf32>,
    %c0_14 = arith.constant 0 : index
    %c0_15 = arith.constant 0 : index
    %c32 = arith.constant 32 : index
    %29 = vector.load %arg2[%c0_14, %c0_15, %c32] : memref<2x16x128xf32, #tpu.memory_space<vmem>>, vector<1x16x32xf32>
    %30 = vector.shape_cast %29 : vector<1x16x32xf32> to vector<16x32xf32>
    %c0_16 = arith.constant 0 : index
    %c0_17 = arith.constant 0 : index
    %c32_18 = arith.constant 32 : index
    %31 = vector.load %arg3[%c0_16, %c0_17, %c32_18] : memref<2x16x128xf32, #tpu.memory_space<vmem>>, vector<1x16x32xf32>
    %32 = vector.shape_cast %31 : vector<1x16x32xf32> to vector<16x32xf32>
    %33 = arith.mulf %32, %32 : vector<16x32xf32>
    %cst_19 = arith.constant dense<0.000000e+00> : vector<16xf32>
    %34 = vector.multi_reduction <add>, %33, %cst_19 [1] : vector<16x32xf32> to vector<16xf32>
    %35 = vector.shape_cast %34 : vector<16xf32> to vector<16x1xf32>
    %cst_20 = arith.constant 1.000000e-24 : f32
    %36 = vector.broadcast %cst_20 : f32 to vector<16x1xf32>
    %37 = arith.maximumf %35, %36 : vector<16x1xf32>
    %38 = math.rsqrt %37 : vector<16x1xf32>
    %cst_21 = arith.constant 0.176776692 : f32
    %39 = vector.broadcast %cst_21 : f32 to vector<16x1xf32>
    %40 = arith.mulf %38, %39 : vector<16x1xf32>
    %41 = vector.broadcast %40 : vector<16x1xf32> to vector<16x32xf32>
    %42 = arith.mulf %32, %41 : vector<16x32xf32>
    %cst_22 = arith.constant dense<0.000000e+00> : vector<16x16xf32>
    %43 = tpu.matmul %30, %42, %cst_22 {dimension_numbers = #tpu.dot_dimension_numbers<[1], [1], [0], [0], [0, 0, 1, 0], [], []>} : vector<16x32xf32>, vector<16x32xf32>, vector<16x16xf32> -> vector<16x16xf32>
    %cst_23 = arith.constant dense<0xFF800000> : vector<16xf32>
    %44 = vector.multi_reduction <maximumf>, %43, %cst_23 [1] : vector<16x16xf32> to vector<16xf32>
    %45 = vector.shape_cast %44 : vector<16xf32> to vector<16x1xf32>
    %46 = vector.broadcast %45 : vector<16x1xf32> to vector<16x16xf32>
    %47 = arith.subf %43, %46 : vector<16x16xf32>
    %48 = math.exp %47 : vector<16x16xf32>
    %cst_24 = arith.constant dense<0.000000e+00> : vector<16xf32>
    %49 = vector.multi_reduction <add>, %48, %cst_24 [1] : vector<16x16xf32> to vector<16xf32>
    %50 = vector.shape_cast %49 : vector<16xf32> to vector<16x1xf32>
    %cst_25 = arith.constant dense<0.000000e+00> : vector<16x32xf32>
    %51 = tpu.matmul %48, %32, %cst_25 {dimension_numbers = #tpu.dot_dimension_numbers<[1], [0], [0], [1], [0, 0, 1, 1], [], []>} : vector<16x16xf32>, vector<16x32xf32>, vector<16x32xf32> -> vector<16x32xf32>
    %52 = tpu.reciprocal %50 {approx = true} : vector<16x1xf32> -> vector<16x1xf32>
    %53 = vector.broadcast %52 : vector<16x1xf32> to vector<16x32xf32>
    %54 = arith.mulf %51, %53 : vector<16x32xf32>
    %c0_26 = arith.constant 0 : index
    %c0_27 = arith.constant 0 : index
    %c32_28 = arith.constant 32 : index
    %55 = vector.load %arg4[%c0_26, %c0_27, %c32_28] : memref<2x16x128xf32, #tpu.memory_space<vmem>>, vector<1x16x32xf32>
    %56 = vector.shape_cast %55 : vector<1x16x32xf32> to vector<16x32xf32>
    %57 = vector.shape_cast %54 : vector<16x32xf32> to vector<1x16x32xf32>
    tpu.vector_store %arg4[%c0_26, %c0_27, %c32_28], %57 {strides = array<i32>} : memref<2x16x128xf32, #tpu.memory_space<vmem>>, vector<1x16x32xf32>,
    %c0_29 = arith.constant 0 : index
    %c0_30 = arith.constant 0 : index
    %c64 = arith.constant 64 : index
    %58 = vector.load %arg2[%c0_29, %c0_30, %c64] : memref<2x16x128xf32, #tpu.memory_space<vmem>>, vector<1x16x32xf32>
    %59 = vector.shape_cast %58 : vector<1x16x32xf32> to vector<16x32xf32>
    %c0_31 = arith.constant 0 : index
    %c0_32 = arith.constant 0 : index
    %c64_33 = arith.constant 64 : index
    %60 = vector.load %arg3[%c0_31, %c0_32, %c64_33] : memref<2x16x128xf32, #tpu.memory_space<vmem>>, vector<1x16x32xf32>
    %61 = vector.shape_cast %60 : vector<1x16x32xf32> to vector<16x32xf32>
    %62 = arith.mulf %61, %61 : vector<16x32xf32>
    %cst_34 = arith.constant dense<0.000000e+00> : vector<16xf32>
    %63 = vector.multi_reduction <add>, %62, %cst_34 [1] : vector<16x32xf32> to vector<16xf32>
    %64 = vector.shape_cast %63 : vector<16xf32> to vector<16x1xf32>
    %cst_35 = arith.constant 1.000000e-24 : f32
    %65 = vector.broadcast %cst_35 : f32 to vector<16x1xf32>
    %66 = arith.maximumf %64, %65 : vector<16x1xf32>
    %67 = math.rsqrt %66 : vector<16x1xf32>
    %cst_36 = arith.constant 0.176776692 : f32
    %68 = vector.broadcast %cst_36 : f32 to vector<16x1xf32>
    %69 = arith.mulf %67, %68 : vector<16x1xf32>
    %70 = vector.broadcast %69 : vector<16x1xf32> to vector<16x32xf32>
    %71 = arith.mulf %61, %70 : vector<16x32xf32>
    %cst_37 = arith.constant dense<0.000000e+00> : vector<16x16xf32>
    %72 = tpu.matmul %59, %71, %cst_37 {dimension_numbers = #tpu.dot_dimension_numbers<[1], [1], [0], [0], [0, 0, 1, 0], [], []>} : vector<16x32xf32>, vector<16x32xf32>, vector<16x16xf32> -> vector<16x16xf32>
    %cst_38 = arith.constant dense<0xFF800000> : vector<16xf32>
    %73 = vector.multi_reduction <maximumf>, %72, %cst_38 [1] : vector<16x16xf32> to vector<16xf32>
    %74 = vector.shape_cast %73 : vector<16xf32> to vector<16x1xf32>
    %75 = vector.broadcast %74 : vector<16x1xf32> to vector<16x16xf32>
    %76 = arith.subf %72, %75 : vector<16x16xf32>
    %77 = math.exp %76 : vector<16x16xf32>
    %cst_39 = arith.constant dense<0.000000e+00> : vector<16xf32>
    %78 = vector.multi_reduction <add>, %77, %cst_39 [1] : vector<16x16xf32> to vector<16xf32>
    %79 = vector.shape_cast %78 : vector<16xf32> to vector<16x1xf32>
    %cst_40 = arith.constant dense<0.000000e+00> : vector<16x32xf32>
    %80 = tpu.matmul %77, %61, %cst_40 {dimension_numbers = #tpu.dot_dimension_numbers<[1], [0], [0], [1], [0, 0, 1, 1], [], []>} : vector<16x16xf32>, vector<16x32xf32>, vector<16x32xf32> -> vector<16x32xf32>
    %81 = tpu.reciprocal %79 {approx = true} : vector<16x1xf32> -> vector<16x1xf32>
    %82 = vector.broadcast %81 : vector<16x1xf32> to vector<16x32xf32>
    %83 = arith.mulf %80, %82 : vector<16x32xf32>
    %c0_41 = arith.constant 0 : index
    %c0_42 = arith.constant 0 : index
    %c64_43 = arith.constant 64 : index
    %84 = vector.load %arg4[%c0_41, %c0_42, %c64_43] : memref<2x16x128xf32, #tpu.memory_space<vmem>>, vector<1x16x32xf32>
    %85 = vector.shape_cast %84 : vector<1x16x32xf32> to vector<16x32xf32>
    %86 = vector.shape_cast %83 : vector<16x32xf32> to vector<1x16x32xf32>
    tpu.vector_store %arg4[%c0_41, %c0_42, %c64_43], %86 {strides = array<i32>} : memref<2x16x128xf32, #tpu.memory_space<vmem>>, vector<1x16x32xf32>,
    %c0_44 = arith.constant 0 : index
    %c0_45 = arith.constant 0 : index
    %c96 = arith.constant 96 : index
    %87 = vector.load %arg2[%c0_44, %c0_45, %c96] : memref<2x16x128xf32, #tpu.memory_space<vmem>>, vector<1x16x32xf32>
    %88 = vector.shape_cast %87 : vector<1x16x32xf32> to vector<16x32xf32>
    %c0_46 = arith.constant 0 : index
    %c0_47 = arith.constant 0 : index
    %c96_48 = arith.constant 96 : index
    %89 = vector.load %arg3[%c0_46, %c0_47, %c96_48] : memref<2x16x128xf32, #tpu.memory_space<vmem>>, vector<1x16x32xf32>
    %90 = vector.shape_cast %89 : vector<1x16x32xf32> to vector<16x32xf32>
    %91 = arith.mulf %90, %90 : vector<16x32xf32>
    %cst_49 = arith.constant dense<0.000000e+00> : vector<16xf32>
    %92 = vector.multi_reduction <add>, %91, %cst_49 [1] : vector<16x32xf32> to vector<16xf32>
    %93 = vector.shape_cast %92 : vector<16xf32> to vector<16x1xf32>
    %cst_50 = arith.constant 1.000000e-24 : f32
    %94 = vector.broadcast %cst_50 : f32 to vector<16x1xf32>
    %95 = arith.maximumf %93, %94 : vector<16x1xf32>
    %96 = math.rsqrt %95 : vector<16x1xf32>
    %cst_51 = arith.constant 0.176776692 : f32
    %97 = vector.broadcast %cst_51 : f32 to vector<16x1xf32>
    %98 = arith.mulf %96, %97 : vector<16x1xf32>
    %99 = vector.broadcast %98 : vector<16x1xf32> to vector<16x32xf32>
    %100 = arith.mulf %90, %99 : vector<16x32xf32>
    %cst_52 = arith.constant dense<0.000000e+00> : vector<16x16xf32>
    %101 = tpu.matmul %88, %100, %cst_52 {dimension_numbers = #tpu.dot_dimension_numbers<[1], [1], [0], [0], [0, 0, 1, 0], [], []>} : vector<16x32xf32>, vector<16x32xf32>, vector<16x16xf32> -> vector<16x16xf32>
    %cst_53 = arith.constant dense<0xFF800000> : vector<16xf32>
    %102 = vector.multi_reduction <maximumf>, %101, %cst_53 [1] : vector<16x16xf32> to vector<16xf32>
    %103 = vector.shape_cast %102 : vector<16xf32> to vector<16x1xf32>
    %104 = vector.broadcast %103 : vector<16x1xf32> to vector<16x16xf32>
    %105 = arith.subf %101, %104 : vector<16x16xf32>
    %106 = math.exp %105 : vector<16x16xf32>
    %cst_54 = arith.constant dense<0.000000e+00> : vector<16xf32>
    %107 = vector.multi_reduction <add>, %106, %cst_54 [1] : vector<16x16xf32> to vector<16xf32>
    %108 = vector.shape_cast %107 : vector<16xf32> to vector<16x1xf32>
    %cst_55 = arith.constant dense<0.000000e+00> : vector<16x32xf32>
    %109 = tpu.matmul %106, %90, %cst_55 {dimension_numbers = #tpu.dot_dimension_numbers<[1], [0], [0], [1], [0, 0, 1, 1], [], []>} : vector<16x16xf32>, vector<16x32xf32>, vector<16x32xf32> -> vector<16x32xf32>
    %110 = tpu.reciprocal %108 {approx = true} : vector<16x1xf32> -> vector<16x1xf32>
    %111 = vector.broadcast %110 : vector<16x1xf32> to vector<16x32xf32>
    %112 = arith.mulf %109, %111 : vector<16x32xf32>
    %c0_56 = arith.constant 0 : index
    %c0_57 = arith.constant 0 : index
    %c96_58 = arith.constant 96 : index
    %113 = vector.load %arg4[%c0_56, %c0_57, %c96_58] : memref<2x16x128xf32, #tpu.memory_space<vmem>>, vector<1x16x32xf32>
    %114 = vector.shape_cast %113 : vector<1x16x32xf32> to vector<16x32xf32>
    %115 = vector.shape_cast %112 : vector<16x32xf32> to vector<1x16x32xf32>
    tpu.vector_store %arg4[%c0_56, %c0_57, %c96_58], %115 {strides = array<i32>} : memref<2x16x128xf32, #tpu.memory_space<vmem>>, vector<1x16x32xf32>,
    %c1 = arith.constant 1 : index
    %c0_59 = arith.constant 0 : index
    %c0_60 = arith.constant 0 : index
    %116 = vector.load %arg2[%c1, %c0_59, %c0_60] : memref<2x16x128xf32, #tpu.memory_space<vmem>>, vector<1x16x32xf32>
    %117 = vector.shape_cast %116 : vector<1x16x32xf32> to vector<16x32xf32>
    %c1_61 = arith.constant 1 : index
    %c0_62 = arith.constant 0 : index
    %c0_63 = arith.constant 0 : index
    %118 = vector.load %arg3[%c1_61, %c0_62, %c0_63] : memref<2x16x128xf32, #tpu.memory_space<vmem>>, vector<1x16x32xf32>
    %119 = vector.shape_cast %118 : vector<1x16x32xf32> to vector<16x32xf32>
    %120 = arith.mulf %119, %119 : vector<16x32xf32>
    %cst_64 = arith.constant dense<0.000000e+00> : vector<16xf32>
    %121 = vector.multi_reduction <add>, %120, %cst_64 [1] : vector<16x32xf32> to vector<16xf32>
    %122 = vector.shape_cast %121 : vector<16xf32> to vector<16x1xf32>
    %cst_65 = arith.constant 1.000000e-24 : f32
    %123 = vector.broadcast %cst_65 : f32 to vector<16x1xf32>
    %124 = arith.maximumf %122, %123 : vector<16x1xf32>
    %125 = math.rsqrt %124 : vector<16x1xf32>
    %cst_66 = arith.constant 0.176776692 : f32
    %126 = vector.broadcast %cst_66 : f32 to vector<16x1xf32>
    %127 = arith.mulf %125, %126 : vector<16x1xf32>
    %128 = vector.broadcast %127 : vector<16x1xf32> to vector<16x32xf32>
    %129 = arith.mulf %119, %128 : vector<16x32xf32>
    %cst_67 = arith.constant dense<0.000000e+00> : vector<16x16xf32>
    %130 = tpu.matmul %117, %129, %cst_67 {dimension_numbers = #tpu.dot_dimension_numbers<[1], [1], [0], [0], [0, 0, 1, 0], [], []>} : vector<16x32xf32>, vector<16x32xf32>, vector<16x16xf32> -> vector<16x16xf32>
    %cst_68 = arith.constant dense<0xFF800000> : vector<16xf32>
    %131 = vector.multi_reduction <maximumf>, %130, %cst_68 [1] : vector<16x16xf32> to vector<16xf32>
    %132 = vector.shape_cast %131 : vector<16xf32> to vector<16x1xf32>
    %133 = vector.broadcast %132 : vector<16x1xf32> to vector<16x16xf32>
    %134 = arith.subf %130, %133 : vector<16x16xf32>
    %135 = math.exp %134 : vector<16x16xf32>
    %cst_69 = arith.constant dense<0.000000e+00> : vector<16xf32>
    %136 = vector.multi_reduction <add>, %135, %cst_69 [1] : vector<16x16xf32> to vector<16xf32>
    %137 = vector.shape_cast %136 : vector<16xf32> to vector<16x1xf32>
    %cst_70 = arith.constant dense<0.000000e+00> : vector<16x32xf32>
    %138 = tpu.matmul %135, %119, %cst_70 {dimension_numbers = #tpu.dot_dimension_numbers<[1], [0], [0], [1], [0, 0, 1, 1], [], []>} : vector<16x16xf32>, vector<16x32xf32>, vector<16x32xf32> -> vector<16x32xf32>
    %139 = tpu.reciprocal %137 {approx = true} : vector<16x1xf32> -> vector<16x1xf32>
    %140 = vector.broadcast %139 : vector<16x1xf32> to vector<16x32xf32>
    %141 = arith.mulf %138, %140 : vector<16x32xf32>
    %c1_71 = arith.constant 1 : index
    %c0_72 = arith.constant 0 : index
    %c0_73 = arith.constant 0 : index
    %142 = vector.load %arg4[%c1_71, %c0_72, %c0_73] : memref<2x16x128xf32, #tpu.memory_space<vmem>>, vector<1x16x32xf32>
    %143 = vector.shape_cast %142 : vector<1x16x32xf32> to vector<16x32xf32>
    %144 = vector.shape_cast %141 : vector<16x32xf32> to vector<1x16x32xf32>
    tpu.vector_store %arg4[%c1_71, %c0_72, %c0_73], %144 {strides = array<i32>} : memref<2x16x128xf32, #tpu.memory_space<vmem>>, vector<1x16x32xf32>,
    %c1_74 = arith.constant 1 : index
    %c0_75 = arith.constant 0 : index
    %c32_76 = arith.constant 32 : index
    %145 = vector.load %arg2[%c1_74, %c0_75, %c32_76] : memref<2x16x128xf32, #tpu.memory_space<vmem>>, vector<1x16x32xf32>
    %146 = vector.shape_cast %145 : vector<1x16x32xf32> to vector<16x32xf32>
    %c1_77 = arith.constant 1 : index
    %c0_78 = arith.constant 0 : index
    %c32_79 = arith.constant 32 : index
    %147 = vector.load %arg3[%c1_77, %c0_78, %c32_79] : memref<2x16x128xf32, #tpu.memory_space<vmem>>, vector<1x16x32xf32>
    %148 = vector.shape_cast %147 : vector<1x16x32xf32> to vector<16x32xf32>
    %149 = arith.mulf %148, %148 : vector<16x32xf32>
    %cst_80 = arith.constant dense<0.000000e+00> : vector<16xf32>
    %150 = vector.multi_reduction <add>, %149, %cst_80 [1] : vector<16x32xf32> to vector<16xf32>
    %151 = vector.shape_cast %150 : vector<16xf32> to vector<16x1xf32>
    %cst_81 = arith.constant 1.000000e-24 : f32
    %152 = vector.broadcast %cst_81 : f32 to vector<16x1xf32>
    %153 = arith.maximumf %151, %152 : vector<16x1xf32>
    %154 = math.rsqrt %153 : vector<16x1xf32>
    %cst_82 = arith.constant 0.176776692 : f32
    %155 = vector.broadcast %cst_82 : f32 to vector<16x1xf32>
    %156 = arith.mulf %154, %155 : vector<16x1xf32>
    %157 = vector.broadcast %156 : vector<16x1xf32> to vector<16x32xf32>
    %158 = arith.mulf %148, %157 : vector<16x32xf32>
    %cst_83 = arith.constant dense<0.000000e+00> : vector<16x16xf32>
    %159 = tpu.matmul %146, %158, %cst_83 {dimension_numbers = #tpu.dot_dimension_numbers<[1], [1], [0], [0], [0, 0, 1, 0], [], []>} : vector<16x32xf32>, vector<16x32xf32>, vector<16x16xf32> -> vector<16x16xf32>
    %cst_84 = arith.constant dense<0xFF800000> : vector<16xf32>
    %160 = vector.multi_reduction <maximumf>, %159, %cst_84 [1] : vector<16x16xf32> to vector<16xf32>
    %161 = vector.shape_cast %160 : vector<16xf32> to vector<16x1xf32>
    %162 = vector.broadcast %161 : vector<16x1xf32> to vector<16x16xf32>
    %163 = arith.subf %159, %162 : vector<16x16xf32>
    %164 = math.exp %163 : vector<16x16xf32>
    %cst_85 = arith.constant dense<0.000000e+00> : vector<16xf32>
    %165 = vector.multi_reduction <add>, %164, %cst_85 [1] : vector<16x16xf32> to vector<16xf32>
    %166 = vector.shape_cast %165 : vector<16xf32> to vector<16x1xf32>
    %cst_86 = arith.constant dense<0.000000e+00> : vector<16x32xf32>
    %167 = tpu.matmul %164, %148, %cst_86 {dimension_numbers = #tpu.dot_dimension_numbers<[1], [0], [0], [1], [0, 0, 1, 1], [], []>} : vector<16x16xf32>, vector<16x32xf32>, vector<16x32xf32> -> vector<16x32xf32>
    %168 = tpu.reciprocal %166 {approx = true} : vector<16x1xf32> -> vector<16x1xf32>
    %169 = vector.broadcast %168 : vector<16x1xf32> to vector<16x32xf32>
    %170 = arith.mulf %167, %169 : vector<16x32xf32>
    %c1_87 = arith.constant 1 : index
    %c0_88 = arith.constant 0 : index
    %c32_89 = arith.constant 32 : index
    %171 = vector.load %arg4[%c1_87, %c0_88, %c32_89] : memref<2x16x128xf32, #tpu.memory_space<vmem>>, vector<1x16x32xf32>
    %172 = vector.shape_cast %171 : vector<1x16x32xf32> to vector<16x32xf32>
    %173 = vector.shape_cast %170 : vector<16x32xf32> to vector<1x16x32xf32>
    tpu.vector_store %arg4[%c1_87, %c0_88, %c32_89], %173 {strides = array<i32>} : memref<2x16x128xf32, #tpu.memory_space<vmem>>, vector<1x16x32xf32>,
    %c1_90 = arith.constant 1 : index
    %c0_91 = arith.constant 0 : index
    %c64_92 = arith.constant 64 : index
    %174 = vector.load %arg2[%c1_90, %c0_91, %c64_92] : memref<2x16x128xf32, #tpu.memory_space<vmem>>, vector<1x16x32xf32>
    %175 = vector.shape_cast %174 : vector<1x16x32xf32> to vector<16x32xf32>
    %c1_93 = arith.constant 1 : index
    %c0_94 = arith.constant 0 : index
    %c64_95 = arith.constant 64 : index
    %176 = vector.load %arg3[%c1_93, %c0_94, %c64_95] : memref<2x16x128xf32, #tpu.memory_space<vmem>>, vector<1x16x32xf32>
    %177 = vector.shape_cast %176 : vector<1x16x32xf32> to vector<16x32xf32>
    %178 = arith.mulf %177, %177 : vector<16x32xf32>
    %cst_96 = arith.constant dense<0.000000e+00> : vector<16xf32>
    %179 = vector.multi_reduction <add>, %178, %cst_96 [1] : vector<16x32xf32> to vector<16xf32>
    %180 = vector.shape_cast %179 : vector<16xf32> to vector<16x1xf32>
    %cst_97 = arith.constant 1.000000e-24 : f32
    %181 = vector.broadcast %cst_97 : f32 to vector<16x1xf32>
    %182 = arith.maximumf %180, %181 : vector<16x1xf32>
    %183 = math.rsqrt %182 : vector<16x1xf32>
    %cst_98 = arith.constant 0.176776692 : f32
    %184 = vector.broadcast %cst_98 : f32 to vector<16x1xf32>
    %185 = arith.mulf %183, %184 : vector<16x1xf32>
    %186 = vector.broadcast %185 : vector<16x1xf32> to vector<16x32xf32>
    %187 = arith.mulf %177, %186 : vector<16x32xf32>
    %cst_99 = arith.constant dense<0.000000e+00> : vector<16x16xf32>
    %188 = tpu.matmul %175, %187, %cst_99 {dimension_numbers = #tpu.dot_dimension_numbers<[1], [1], [0], [0], [0, 0, 1, 0], [], []>} : vector<16x32xf32>, vector<16x32xf32>, vector<16x16xf32> -> vector<16x16xf32>
    %cst_100 = arith.constant dense<0xFF800000> : vector<16xf32>
    %189 = vector.multi_reduction <maximumf>, %188, %cst_100 [1] : vector<16x16xf32> to vector<16xf32>
    %190 = vector.shape_cast %189 : vector<16xf32> to vector<16x1xf32>
    %191 = vector.broadcast %190 : vector<16x1xf32> to vector<16x16xf32>
    %192 = arith.subf %188, %191 : vector<16x16xf32>
    %193 = math.exp %192 : vector<16x16xf32>
    %cst_101 = arith.constant dense<0.000000e+00> : vector<16xf32>
    %194 = vector.multi_reduction <add>, %193, %cst_101 [1] : vector<16x16xf32> to vector<16xf32>
    %195 = vector.shape_cast %194 : vector<16xf32> to vector<16x1xf32>
    %cst_102 = arith.constant dense<0.000000e+00> : vector<16x32xf32>
    %196 = tpu.matmul %193, %177, %cst_102 {dimension_numbers = #tpu.dot_dimension_numbers<[1], [0], [0], [1], [0, 0, 1, 1], [], []>} : vector<16x16xf32>, vector<16x32xf32>, vector<16x32xf32> -> vector<16x32xf32>
    %197 = tpu.reciprocal %195 {approx = true} : vector<16x1xf32> -> vector<16x1xf32>
    %198 = vector.broadcast %197 : vector<16x1xf32> to vector<16x32xf32>
    %199 = arith.mulf %196, %198 : vector<16x32xf32>
    %c1_103 = arith.constant 1 : index
    %c0_104 = arith.constant 0 : index
    %c64_105 = arith.constant 64 : index
    %200 = vector.load %arg4[%c1_103, %c0_104, %c64_105] : memref<2x16x128xf32, #tpu.memory_space<vmem>>, vector<1x16x32xf32>
    %201 = vector.shape_cast %200 : vector<1x16x32xf32> to vector<16x32xf32>
    %202 = vector.shape_cast %199 : vector<16x32xf32> to vector<1x16x32xf32>
    tpu.vector_store %arg4[%c1_103, %c0_104, %c64_105], %202 {strides = array<i32>} : memref<2x16x128xf32, #tpu.memory_space<vmem>>, vector<1x16x32xf32>,
    %c1_106 = arith.constant 1 : index
    %c0_107 = arith.constant 0 : index
    %c96_108 = arith.constant 96 : index
    %203 = vector.load %arg2[%c1_106, %c0_107, %c96_108] : memref<2x16x128xf32, #tpu.memory_space<vmem>>, vector<1x16x32xf32>
    %204 = vector.shape_cast %203 : vector<1x16x32xf32> to vector<16x32xf32>
    %c1_109 = arith.constant 1 : index
    %c0_110 = arith.constant 0 : index
    %c96_111 = arith.constant 96 : index
    %205 = vector.load %arg3[%c1_109, %c0_110, %c96_111] : memref<2x16x128xf32, #tpu.memory_space<vmem>>, vector<1x16x32xf32>
    %206 = vector.shape_cast %205 : vector<1x16x32xf32> to vector<16x32xf32>
    %207 = arith.mulf %206, %206 : vector<16x32xf32>
    %cst_112 = arith.constant dense<0.000000e+00> : vector<16xf32>
    %208 = vector.multi_reduction <add>, %207, %cst_112 [1] : vector<16x32xf32> to vector<16xf32>
    %209 = vector.shape_cast %208 : vector<16xf32> to vector<16x1xf32>
    %cst_113 = arith.constant 1.000000e-24 : f32
    %210 = vector.broadcast %cst_113 : f32 to vector<16x1xf32>
    %211 = arith.maximumf %209, %210 : vector<16x1xf32>
    %212 = math.rsqrt %211 : vector<16x1xf32>
    %cst_114 = arith.constant 0.176776692 : f32
    %213 = vector.broadcast %cst_114 : f32 to vector<16x1xf32>
    %214 = arith.mulf %212, %213 : vector<16x1xf32>
    %215 = vector.broadcast %214 : vector<16x1xf32> to vector<16x32xf32>
    %216 = arith.mulf %206, %215 : vector<16x32xf32>
    %cst_115 = arith.constant dense<0.000000e+00> : vector<16x16xf32>
    %217 = tpu.matmul %204, %216, %cst_115 {dimension_numbers = #tpu.dot_dimension_numbers<[1], [1], [0], [0], [0, 0, 1, 0], [], []>} : vector<16x32xf32>, vector<16x32xf32>, vector<16x16xf32> -> vector<16x16xf32>
    %cst_116 = arith.constant dense<0xFF800000> : vector<16xf32>
    %218 = vector.multi_reduction <maximumf>, %217, %cst_116 [1] : vector<16x16xf32> to vector<16xf32>
    %219 = vector.shape_cast %218 : vector<16xf32> to vector<16x1xf32>
    %220 = vector.broadcast %219 : vector<16x1xf32> to vector<16x16xf32>
    %221 = arith.subf %217, %220 : vector<16x16xf32>
    %222 = math.exp %221 : vector<16x16xf32>
    %cst_117 = arith.constant dense<0.000000e+00> : vector<16xf32>
    %223 = vector.multi_reduction <add>, %222, %cst_117 [1] : vector<16x16xf32> to vector<16xf32>
    %224 = vector.shape_cast %223 : vector<16xf32> to vector<16x1xf32>
    %cst_118 = arith.constant dense<0.000000e+00> : vector<16x32xf32>
    %225 = tpu.matmul %222, %206, %cst_118 {dimension_numbers = #tpu.dot_dimension_numbers<[1], [0], [0], [1], [0, 0, 1, 1], [], []>} : vector<16x16xf32>, vector<16x32xf32>, vector<16x32xf32> -> vector<16x32xf32>
    %226 = tpu.reciprocal %224 {approx = true} : vector<16x1xf32> -> vector<16x1xf32>
    %227 = vector.broadcast %226 : vector<16x1xf32> to vector<16x32xf32>
    %228 = arith.mulf %225, %227 : vector<16x32xf32>
    %c1_119 = arith.constant 1 : index
    %c0_120 = arith.constant 0 : index
    %c96_121 = arith.constant 96 : index
    %229 = vector.load %arg4[%c1_119, %c0_120, %c96_121] : memref<2x16x128xf32, #tpu.memory_space<vmem>>, vector<1x16x32xf32>
    %230 = vector.shape_cast %229 : vector<1x16x32xf32> to vector<16x32xf32>
    %231 = vector.shape_cast %228 : vector<16x32xf32> to vector<1x16x32xf32>
    tpu.vector_store %arg4[%c1_119, %c0_120, %c96_121], %231 {strides = array<i32>} : memref<2x16x128xf32, #tpu.memory_space<vmem>>, vector<1x16x32xf32>,
    return
  }
  func.func @transform_0(%arg0: i32, %arg1: i32) -> (i32, i32, i32) {
    %c0_i32 = arith.constant 0 : i32
    %c0_i32_0 = arith.constant 0 : i32
    return %arg0, %arg1, %c0_i32 : i32, i32, i32
  }
  func.func @transform_1(%arg0: i32, %arg1: i32) -> (i32, i32, i32) {
    %c0_i32 = arith.constant 0 : i32
    %c0_i32_0 = arith.constant 0 : i32
    %c0_i32_1 = arith.constant 0 : i32
    return %arg0, %c0_i32, %c0_i32_0 : i32, i32, i32
  }
  func.func @transform_2(%arg0: i32, %arg1: i32) -> (i32, i32, i32) {
    %c0_i32 = arith.constant 0 : i32
    %c0_i32_0 = arith.constant 0 : i32
    return %arg0, %arg1, %c0_i32 : i32, i32, i32
  }
}

</mosaic_0001>

<llo_original>
// kernel: tpu_custom_call.1
$region0: #{tpu_custom_call.1}
  #allocation0 [shape = 'u32[]', space=smem, size = 0x4, offset = 0x4, fixed_abs, tag = 'smem constant byte address 0x4 - core index']
  #allocation1 [shape = 'u32[144,128]{1,0:T(1,128)}', space=vmem, size = 0x12000, scoped, tag = 'internal scratch']
  %s0 = inlined_call_operand.hbm [shape: f32[2,16,128], index: 0, kind: input, shape index: {}]
  %s1 = inlined_call_operand.hbm [shape: f32[2,16,128], index: 1, kind: input, shape index: {}]
  %s2 = inlined_call_operand.hbm [shape: f32[2,16,128], index: 2, kind: output, shape index: {}]
  %s3 = sld [smem:[#allocation0]]
  $region26: #{tpu_custom_call.1} parent=0
    _
  %s5 = ssub.s32 1, %s3
  %s6 = scalar_select 0, %s5, %s3
  $region1: #{tpu_custom_call.1} parent=0
    #allocation2 [shape = 'u8[16384]{0}', space=vmem, size = 0x4000, scoped, tag = 'input window, operand 0, single buffered']
    #allocation3 [shape = 's32[1]{0}', space=sflag, size = 0x4, scoped, tag = 'scoped memory for tpu_custom_call.1']
    #allocation4 [shape = 's32[1]{0}', space=sflag, size = 0x4, scoped, tag = 'scoped memory for tpu_custom_call.1']
    #allocation5 [shape = 'u8[16384]{0}', space=vmem, size = 0x4000, scoped, tag = 'input window, operand 1, single buffered']
    #allocation6 [shape = 's32[1]{0}', space=sflag, size = 0x4, scoped, tag = 'scoped memory for tpu_custom_call.1']
    #allocation7 [shape = 'u8[16384]{0}', space=vmem, size = 0x4000, scoped, tag = 'output window, operand 0, single buffered']
    %7 = vsyncpa [#allocation3], 0
    %8 = vsyncpa [#allocation6], 0
    %9 = vsyncpa [#allocation4], 0
    // Predicated region
    $region2: #{tpu_custom_call.1} parent=1 // pred_check
      _
    $region3: #{tpu_custom_call.1} parent=1 // pred_check_branch
      %11 = sbr.rel (0) target = $region5
    $region4: #{tpu_custom_call.1} parent=1 // pred_region
      %s13 = ssub.s32 512, 512
      %14 = vsyncadd [#allocation3], %s13
      %s15 = sshll.u32 [#allocation2], 4
      %s16 = int_to_ptr.vmem [resolvable:$true] %s15
      %21 = dma.hbm_to_vmem [thread:$0]  %s0, 512, %s16, [#allocation3], 128, 128, 8
    $region5: #{tpu_custom_call.1} parent=1 // pred_fallthru
      _
    // Predicated region
    $region6: #{tpu_custom_call.1} parent=1 // pred_check
      _
    $region7: #{tpu_custom_call.1} parent=1 // pred_check_branch
      %23 = sbr.rel (0) target = $region9
    $region8: #{tpu_custom_call.1} parent=1 // pred_region
      %s25 = ssub.s32 512, 512
      %26 = vsyncadd [#allocation6], %s25
      %s27 = sshll.u32 [#allocation5], 4
      %s28 = int_to_ptr.vmem [resolvable:$true] %s27
      %33 = dma.hbm_to_vmem [thread:$0]  %s1, 512, %s28, [#allocation6], 128, 128, 8
    $region9: #{tpu_custom_call.1} parent=1 // pred_fallthru
      _
    // Predicated region
    $region10: #{tpu_custom_call.1} parent=1 // pred_check
      _
    $region11: #{tpu_custom_call.1} parent=1 // pred_check_branch
      %35 = sbr.rel (0) target = $region13
    $region12: #{tpu_custom_call.1} parent=1 // pred_region
      %36 = dma.done [#allocation3], 512
    $region13: #{tpu_custom_call.1} parent=1 // pred_fallthru
      _
    // Predicated region
    $region14: #{tpu_custom_call.1} parent=1 // pred_check
      _
    $region15: #{tpu_custom_call.1} parent=1 // pred_check_branch
      %38 = sbr.rel (0) target = $region17
    $region16: #{tpu_custom_call.1} parent=1 // pred_region
      %39 = dma.done [#allocation6], 512
    $region17: #{tpu_custom_call.1} parent=1 // pred_fallthru
      _
    %v40 = vld [vmem:[#allocation2] sm:$0xff]
    %v41 = vld [vmem:[#allocation2 + $0x8] sm:$0xff]
    %v42 = vld [vmem:[#allocation5] sm:$0xff]
    %v43 = vld [vmem:[#allocation5 + $0x8] sm:$0xff]
    %v44 = vmul.f32 %v42, %v42
    %v45 = vmul.f32 %v43, %v43
    %vm46 = vcmask 261120
    %v47 = vsel %vm46, %v44, 0.0
    %48 = vadd.xlane.f32.xlu0 %v47
    %v49 = vpop.xlane.xlu0 %48
    %v50 = vsel %vm46, %v45, 0.0
    %51 = vadd.xlane.f32.xlu0 %v50
    %v52 = vpop.xlane.xlu0 %51
    %v53 = vmax.f32 %v49, 1e-24
    %v54 = vmax.f32 %v52, 1e-24
    %v55 = vrsqrt.pop %v53
    %v56 = vrsqrt.pop %v54
    %v57 = vmul.f32 %v55, 0.17677669
    %v58 = vmul.f32 %v56, 0.17677669
    %v59 = vmul.f32 %v42, %v57
    %v60 = vmul.f32 %v43, %v58
    %v62 = vsel %vm46, %v40, 0
    %v65 = vsel %vm46, %v41, 0
    %v68 = vsel %vm46, %v59, 0
    %v71 = vsel %vm46, %v60, 0
    %73 = vmatprep.subr.mxu0 0.0
    %74 = vmatpush1.xpose.msra.mxu0 %v68
    %75 = vmatprep.subr.mxu0 0.0
    %76 = vmatpush1.xpose.msra.mxu0 %v71
    %77 = vmatprep.subr.mxu0 0.0
    %78 = vmatpush1.xpose.msra.mxu0 0.0
    %79 = vmatprep.subr.mxu0 0.0
    %80 = vmatpush1.xpose.msra.mxu0 0.0
    %81 = vmatprep.subr.mxu0 0.0
    %82 = vmatpush1.xpose.msra.mxu0 0.0
    %83 = vmatprep.subr.mxu0 0.0
    %84 = vmatpush1.xpose.msra.mxu0 0.0
    %85 = vmatprep.subr.mxu0 0.0
    %86 = vmatpush1.xpose.msra.mxu0 0.0
    %87 = vmatprep.subr.mxu0 0.0
    %88 = vmatpush1.xpose.msra.mxu0 0.0
    %89 = vmatprep.subr.mxu0 0.0
    %90 = vmatpush1.xpose.msra.mxu0 0.0
    %91 = vmatprep.subr.mxu0 0.0
    %92 = vmatpush1.xpose.msra.mxu0 0.0
    %93 = vmatprep.subr.mxu0 0.0
    %94 = vmatpush1.xpose.msra.mxu0 0.0
    %95 = vmatprep.subr.mxu0 0.0
    %96 = vmatpush1.xpose.msra.mxu0 0.0
    %97 = vmatprep.subr.mxu0 0.0
    %98 = vmatpush1.xpose.msra.mxu0 0.0
    %99 = vmatprep.subr.mxu0 0.0
    %100 = vmatpush1.xpose.msra.mxu0 0.0
    %101 = vmatprep.subr.mxu0 0.0
    %102 = vmatpush1.xpose.msra.mxu0 0.0
    %103 = vmatprep.subr.mxu0 0.0
    %104 = vmatpush1.xpose.msra.mxu0 0.0
    %105 = vmatprep.subr.mxu0 0.0
    %106 = vmatpush1.xpose.msra.mxu0 0.0
    %107 = vmatprep.subr.mxu0 0.0
    %108 = vmatpush1.xpose.msra.mxu0 0.0
    %109 = vmatprep.subr.mxu0 0.0
    %110 = vmatpush1.xpose.msra.mxu0 0.0
    %111 = vmatprep.subr.mxu0 0.0
    %112 = vmatpush1.xpose.msra.mxu0 0.0
    %113 = vmatprep.subr.mxu0 0.0
    %114 = vmatpush1.xpose.msra.mxu0 0.0
    %115 = vmatprep.subr.mxu0 0.0
    %116 = vmatpush1.xpose.msra.mxu0 0.0
    %117 = vmatprep.subr.mxu0 0.0
    %118 = vmatpush1.xpose.msra.mxu0 0.0
    %119 = vmatprep.subr.mxu0 0.0
    %120 = vmatpush1.xpose.msra.mxu0 0.0
    %121 = vmatprep.subr.mxu0 0.0
    %122 = vmatpush1.xpose.msra.mxu0 0.0
    %123 = vmatprep.subr.mxu0 0.0
    %124 = vmatpush1.xpose.msra.mxu0 0.0
    %125 = vmatprep.subr.mxu0 0.0
    %126 = vmatpush1.xpose.msra.mxu0 0.0
    %127 = vmatprep.subr.mxu0 0.0
    %128 = vmatpush1.xpose.msra.mxu0 0.0
    %129 = vmatprep.subr.mxu0 0.0
    %130 = vmatpush1.xpose.msra.mxu0 0.0
    %131 = vmatprep.subr.mxu0 0.0
    %132 = vmatpush1.xpose.msra.mxu0 0.0
    %133 = vmatprep.subr.mxu0 0.0
    %134 = vmatpush1.xpose.msra.mxu0 0.0
    %135 = vmatprep.subr.mxu0 0.0
    %136 = vmatpush1.xpose.msra.mxu0 0.0
    %137 = vmatprep.mubr.f32.mxu0 0.0
    %138 = vmatmul.mubr.f32.gmra.mrb[0].mxu0 %v62
    %v139 = vpop.f32.mrb[0].mxu0
    %v140 = vadd.f32 0.0, %v139
    %v141 = vpop.f32.mrb[0].mxu0
    %142 = vmatprep.mubr.f32.mxu0 0.0
    %143 = vmatmul.mubr.f32.gmra.mrb[0].mxu0 %v65
    %v144 = vpop.f32.mrb[0].mxu0
    %v145 = vadd.f32 0.0, %v144
    %v146 = vpop.f32.mrb[0].mxu0
    %147 = vdwg.mxu0
    %vm148 = vcmask 130048
    %v149 = vsel %vm148, %v140, -inf
    %150 = vmax.xlane.f32.xlu0 %v149
    %v151 = vpop.xlane.xlu0 %150
    %v152 = vsel %vm148, %v145, -inf
    %153 = vmax.xlane.f32.xlu0 %v152
    %v154 = vpop.xlane.xlu0 %153
    %v155 = vsub.f32 %v140, %v151
    %v156 = vsub.f32 %v145, %v154
    %v157 = vmul.f32 %v155, 1.442695
    %v158 = vpow.pop %v157
    %v159 = vmul.f32 %v156, 1.442695
    %v160 = vpow.pop %v159
    %v161 = vsel %vm148, %v158, 0.0
    %162 = vadd.xlane.f32.xlu0 %v161
    %v163 = vpop.xlane.xlu0 %162
    %v164 = vsel %vm148, %v160, 0.0
    %165 = vadd.xlane.f32.xlu0 %v164
    %v166 = vpop.xlane.xlu0 %165
    %v168 = vsel %vm148, %v158, 0
    %v171 = vsel %vm148, %v160, 0
    %173 = vmatprep.subr.mxu0 0.0
    %174 = vmatpush1.msra.mxu0 %v42
    %175 = vmatprep.subr.mxu0 0.0
    %176 = vmatpush1.msra.mxu0 %v43
    %177 = vmatprep.subr.mxu0 0.0
    %178 = vmatpush1.msra.mxu0 0.0
    %179 = vmatprep.subr.mxu0 0.0
    %180 = vmatpush1.msra.mxu0 0.0
    %181 = vmatprep.subr.mxu0 0.0
    %182 = vmatpush1.msra.mxu0 0.0
    %183 = vmatprep.subr.mxu0 0.0
    %184 = vmatpush1.msra.mxu0 0.0
    %185 = vmatprep.subr.mxu0 0.0
    %186 = vmatpush1.msra.mxu0 0.0
    %187 = vmatprep.subr.mxu0 0.0
    %188 = vmatpush1.msra.mxu0 0.0
    %189 = vmatprep.subr.mxu0 0.0
    %190 = vmatpush1.msra.mxu0 0.0
    %191 = vmatprep.subr.mxu0 0.0
    %192 = vmatpush1.msra.mxu0 0.0
    %193 = vmatprep.subr.mxu0 0.0
    %194 = vmatpush1.msra.mxu0 0.0
    %195 = vmatprep.subr.mxu0 0.0
    %196 = vmatpush1.msra.mxu0 0.0
    %197 = vmatprep.subr.mxu0 0.0
    %198 = vmatpush1.msra.mxu0 0.0
    %199 = vmatprep.subr.mxu0 0.0
    %200 = vmatpush1.msra.mxu0 0.0
    %201 = vmatprep.subr.mxu0 0.0
    %202 = vmatpush1.msra.mxu0 0.0
    %203 = vmatprep.subr.mxu0 0.0
    %204 = vmatpush1.msra.mxu0 0.0
    %205 = vmatprep.subr.mxu0 0.0
    %206 = vmatpush1.msra.mxu0 0.0
    %207 = vmatprep.subr.mxu0 0.0
    %208 = vmatpush1.msra.mxu0 0.0
    %209 = vmatprep.subr.mxu0 0.0
    %210 = vmatpush1.msra.mxu0 0.0
    %211 = vmatprep.subr.mxu0 0.0
    %212 = vmatpush1.msra.mxu0 0.0
    %213 = vmatprep.subr.mxu0 0.0
    %214 = vmatpush1.msra.mxu0 0.0
    %215 = vmatprep.subr.mxu0 0.0
    %216 = vmatpush1.msra.mxu0 0.0
    %217 = vmatprep.subr.mxu0 0.0
    %218 = vmatpush1.msra.mxu0 0.0
    %219 = vmatprep.subr.mxu0 0.0
    %220 = vmatpush1.msra.mxu0 0.0
    %221 = vmatprep.subr.mxu0 0.0
    %222 = vmatpush1.msra.mxu0 0.0
    %223 = vmatprep.subr.mxu0 0.0
    %224 = vmatpush1.msra.mxu0 0.0
    %225 = vmatprep.subr.mxu0 0.0
    %226 = vmatpush1.msra.mxu0 0.0
    %227 = vmatprep.subr.mxu0 0.0
    %228 = vmatpush1.msra.mxu0 0.0
    %229 = vmatprep.subr.mxu0 0.0
    %230 = vmatpush1.msra.mxu0 0.0
    %231 = vmatprep.subr.mxu0 0.0
    %232 = vmatpush1.msra.mxu0 0.0
    %233 = vmatprep.subr.mxu0 0.0
    %234 = vmatpush1.msra.mxu0 0.0
    %235 = vmatprep.subr.mxu0 0.0
    %236 = vmatpush1.msra.mxu0 0.0
    %237 = vmatprep.mubr.f32.mxu0 0.0
    %238 = vmatmul.mubr.f32.gmra.mrb[0].mxu0 %v168
    %v239 = vpop.f32.mrb[0].mxu0
    %v240 = vadd.f32 0.0, %v239
    %v241 = vpop.f32.mrb[0].mxu0
    %242 = vmatprep.mubr.f32.mxu0 0.0
    %243 = vmatmul.mubr.f32.gmra.mrb[0].mxu0 %v171
    %v244 = vpop.f32.mrb[0].mxu0
    %v245 = vadd.f32 0.0, %v244
    %v246 = vpop.f32.mrb[0].mxu0
    %247 = vdwg.mxu0
    %v248 = vrcp.pop %v163
    %v249 = vrcp.pop %v166
    %v250 = vmul.f32 %v240, %v248
    %v251 = vmul.f32 %v245, %v249
    %252 = vst.msk [vmem:[#allocation7] sm:$0xff] %vm46, %v250
    %253 = vst.msk [vmem:[#allocation7 + $0x8] sm:$0xff] %vm46, %v251
    %v254 = vld [vmem:[#allocation2] sm:$0xff]
    %v255 = vld [vmem:[#allocation2 + $0x8] sm:$0xff]
    %v256 = vld [vmem:[#allocation5] sm:$0xff]
    %v257 = vld [vmem:[#allocation5 + $0x8] sm:$0xff]
    %v258 = vmul.f32 %v256, %v256
    %v259 = vmul.f32 %v257, %v257
    %262 = vrot.lane.b32.xlu0 %v258, 96
    %v263 = vpop.permute.xlu0 %262
    %264 = vrot.lane.b32.xlu0 %v259, 96
    %v265 = vpop.permute.xlu0 %264
    %v268 = vsel %vm46, %v263, 0.0
    %269 = vadd.xlane.f32.xlu0 %v268
    %v270 = vpop.xlane.xlu0 %269
    %v271 = vsel %vm46, %v265, 0.0
    %272 = vadd.xlane.f32.xlu0 %v271
    %v273 = vpop.xlane.xlu0 %272
    %v274 = vmax.f32 %v270, 1e-24
    %v275 = vmax.f32 %v273, 1e-24
    %v276 = vrsqrt.pop %v274
    %v277 = vrsqrt.pop %v275
    %v278 = vmul.f32 %v276, 0.17677669
    %v279 = vmul.f32 %v277, 0.17677669
    %v280 = vmul.f32 %v256, %v278
    %v281 = vmul.f32 %v257, %v279
    %284 = vrot.lane.b32.xlu0 %v254, 96
    %v285 = vpop.permute.xlu0 %284
    %286 = vrot.lane.b32.xlu0 %v255, 96
    %v287 = vpop.permute.xlu0 %286
    %290 = vrot.lane.b32.xlu0 %v280, 96
    %v291 = vpop.permute.xlu0 %290
    %292 = vrot.lane.b32.xlu0 %v281, 96
    %v293 = vpop.permute.xlu0 %292
    %v294 = vsel %vm46, %v285, 0
    %v296 = vsel %vm46, %v287, 0
    %v298 = vsel %vm46, %v291, 0
    %v300 = vsel %vm46, %v293, 0
    %302 = vmatprep.subr.mxu0 0.0
    %303 = vmatpush1.xpose.msra.mxu0 %v298
    %304 = vmatprep.subr.mxu0 0.0
    %305 = vmatpush1.xpose.msra.mxu0 %v300
    %306 = vmatprep.subr.mxu0 0.0
    %307 = vmatpush1.xpose.msra.mxu0 0.0
    %308 = vmatprep.subr.mxu0 0.0
    %309 = vmatpush1.xpose.msra.mxu0 0.0
    %310 = vmatprep.subr.mxu0 0.0
    %311 = vmatpush1.xpose.msra.mxu0 0.0
    %312 = vmatprep.subr.mxu0 0.0
    %313 = vmatpush1.xpose.msra.mxu0 0.0
    %314 = vmatprep.subr.mxu0 0.0
    %315 = vmatpush1.xpose.msra.mxu0 0.0
    %316 = vmatprep.subr.mxu0 0.0
    %317 = vmatpush1.xpose.msra.mxu0 0.0
    %318 = vmatprep.subr.mxu0 0.0
    %319 = vmatpush1.xpose.msra.mxu0 0.0
    %320 = vmatprep.subr.mxu0 0.0
    %321 = vmatpush1.xpose.msra.mxu0 0.0
    %322 = vmatprep.subr.mxu0 0.0
    %323 = vmatpush1.xpose.msra.mxu0 0.0
    %324 = vmatprep.subr.mxu0 0.0
    %325 = vmatpush1.xpose.msra.mxu0 0.0
    %326 = vmatprep.subr.mxu0 0.0
    %327 = vmatpush1.xpose.msra.mxu0 0.0
    %328 = vmatprep.subr.mxu0 0.0
    %329 = vmatpush1.xpose.msra.mxu0 0.0
    %330 = vmatprep.subr.mxu0 0.0
    %331 = vmatpush1.xpose.msra.mxu0 0.0
    %332 = vmatprep.subr.mxu0 0.0
    %333 = vmatpush1.xpose.msra.mxu0 0.0
    %334 = vmatprep.subr.mxu0 0.0
    %335 = vmatpush1.xpose.msra.mxu0 0.0
    %336 = vmatprep.subr.mxu0 0.0
    %337 = vmatpush1.xpose.msra.mxu0 0.0
    %338 = vmatprep.subr.mxu0 0.0
    %339 = vmatpush1.xpose.msra.mxu0 0.0
    %340 = vmatprep.subr.mxu0 0.0
    %341 = vmatpush1.xpose.msra.mxu0 0.0
    %342 = vmatprep.subr.mxu0 0.0
    %343 = vmatpush1.xpose.msra.mxu0 0.0
    %344 = vmatprep.subr.mxu0 0.0
    %345 = vmatpush1.xpose.msra.mxu0 0.0
    %346 = vmatprep.subr.mxu0 0.0
    %347 = vmatpush1.xpose.msra.mxu0 0.0
    %348 = vmatprep.subr.mxu0 0.0
    %349 = vmatpush1.xpose.msra.mxu0 0.0
    %350 = vmatprep.subr.mxu0 0.0
    %351 = vmatpush1.xpose.msra.mxu0 0.0
    %352 = vmatprep.subr.mxu0 0.0
    %353 = vmatpush1.xpose.msra.mxu0 0.0
    %354 = vmatprep.subr.mxu0 0.0
    %355 = vmatpush1.xpose.msra.mxu0 0.0
    %356 = vmatprep.subr.mxu0 0.0
    %357 = vmatpush1.xpose.msra.mxu0 0.0
    %358 = vmatprep.subr.mxu0 0.0
    %359 = vmatpush1.xpose.msra.mxu0 0.0
    %360 = vmatprep.subr.mxu0 0.0
    %361 = vmatpush1.xpose.msra.mxu0 0.0
    %362 = vmatprep.subr.mxu0 0.0
    %363 = vmatpush1.xpose.msra.mxu0 0.0
    %364 = vmatprep.subr.mxu0 0.0
    %365 = vmatpush1.xpose.msra.mxu0 0.0
    %366 = vmatprep.mubr.f32.mxu0 0.0
    %367 = vmatmul.mubr.f32.gmra.mrb[0].mxu0 %v294
    %v368 = vpop.f32.mrb[0].mxu0
    %v369 = vadd.f32 0.0, %v368
    %v370 = vpop.f32.mrb[0].mxu0
    %371 = vmatprep.mubr.f32.mxu0 0.0
    %372 = vmatmul.mubr.f32.gmra.mrb[0].mxu0 %v296
    %v373 = vpop.f32.mrb[0].mxu0
    %v374 = vadd.f32 0.0, %v373
    %v375 = vpop.f32.mrb[0].mxu0
    %376 = vdwg.mxu0
    %v377 = vsel %vm148, %v369, -inf
    %378 = vmax.xlane.f32.xlu0 %v377
    %v379 = vpop.xlane.xlu0 %378
    %v380 = vsel %vm148, %v374, -inf
    %381 = vmax.xlane.f32.xlu0 %v380
    %v382 = vpop.xlane.xlu0 %381
    %v383 = vsub.f32 %v369, %v379
    %v384 = vsub.f32 %v374, %v382
    %v385 = vmul.f32 %v383, 1.442695
    %v386 = vpow.pop %v385
    %v387 = vmul.f32 %v384, 1.442695
    %v388 = vpow.pop %v387
    %v389 = vsel %vm148, %v386, 0.0
    %390 = vadd.xlane.f32.xlu0 %v389
    %v391 = vpop.xlane.xlu0 %390
    %v392 = vsel %vm148, %v388, 0.0
    %393 = vadd.xlane.f32.xlu0 %v392
    %v394 = vpop.xlane.xlu0 %393
    %397 = vrot.lane.b32.xlu0 %v256, 96
    %v398 = vpop.permute.xlu0 %397
    %399 = vrot.lane.b32.xlu0 %v257, 96
    %v400 = vpop.permute.xlu0 %399
    %v404 = vsel %vm148, %v386, 0
    %v407 = vsel %vm148, %v388, 0
    %409 = vmatprep.subr.mxu0 0.0
    %410 = vmatpush1.msra.mxu0 %v398
    %411 = vmatprep.subr.mxu0 0.0
    %412 = vmatpush1.msra.mxu0 %v400
    %413 = vmatprep.subr.mxu0 0.0
    %414 = vmatpush1.msra.mxu0 0.0
    %415 = vmatprep.subr.mxu0 0.0
    %416 = vmatpush1.msra.mxu0 0.0
    %417 = vmatprep.subr.mxu0 0.0
    %418 = vmatpush1.msra.mxu0 0.0
    %419 = vmatprep.subr.mxu0 0.0
    %420 = vmatpush1.msra.mxu0 0.0
    %421 = vmatprep.subr.mxu0 0.0
    %422 = vmatpush1.msra.mxu0 0.0
    %423 = vmatprep.subr.mxu0 0.0
    %424 = vmatpush1.msra.mxu0 0.0
    %425 = vmatprep.subr.mxu0 0.0
    %426 = vmatpush1.msra.mxu0 0.0
    %427 = vmatprep.subr.mxu0 0.0
    %428 = vmatpush1.msra.mxu0 0.0
    %429 = vmatprep.subr.mxu0 0.0
    %430 = vmatpush1.msra.mxu0 0.0
    %431 = vmatprep.subr.mxu0 0.0
    %432 = vmatpush1.msra.mxu0 0.0
    %433 = vmatprep.subr.mxu0 0.0
    %434 = vmatpush1.msra.mxu0 0.0
    %435 = vmatprep.subr.mxu0 0.0
    %436 = vmatpush1.msra.mxu0 0.0
    %437 = vmatprep.subr.mxu0 0.0
    %438 = vmatpush1.msra.mxu0 0.0
    %439 = vmatprep.subr.mxu0 0.0
    %440 = vmatpush1.msra.mxu0 0.0
    %441 = vmatprep.subr.mxu0 0.0
    %442 = vmatpush1.msra.mxu0 0.0
    %443 = vmatprep.subr.mxu0 0.0
    %444 = vmatpush1.msra.mxu0 0.0
    %445 = vmatprep.subr.mxu0 0.0
    %446 = vmatpush1.msra.mxu0 0.0
    %447 = vmatprep.subr.mxu0 0.0
    %448 = vmatpush1.msra.mxu0 0.0
    %449 = vmatprep.subr.mxu0 0.0
    %450 = vmatpush1.msra.mxu0 0.0
    %451 = vmatprep.subr.mxu0 0.0
    %452 = vmatpush1.msra.mxu0 0.0
    %453 = vmatprep.subr.mxu0 0.0
    %454 = vmatpush1.msra.mxu0 0.0
    %455 = vmatprep.subr.mxu0 0.0
    %456 = vmatpush1.msra.mxu0 0.0
    %457 = vmatprep.subr.mxu0 0.0
    %458 = vmatpush1.msra.mxu0 0.0
    %459 = vmatprep.subr.mxu0 0.0
    %460 = vmatpush1.msra.mxu0 0.0
    %461 = vmatprep.subr.mxu0 0.0
    %462 = vmatpush1.msra.mxu0 0.0
    %463 = vmatprep.subr.mxu0 0.0
    %464 = vmatpush1.msra.mxu0 0.0
    %465 = vmatprep.subr.mxu0 0.0
    %466 = vmatpush1.msra.mxu0 0.0
    %467 = vmatprep.subr.mxu0 0.0
    %468 = vmatpush1.msra.mxu0 0.0
    %469 = vmatprep.subr.mxu0 0.0
    %470 = vmatpush1.msra.mxu0 0.0
    %471 = vmatprep.subr.mxu0 0.0
    %472 = vmatpush1.msra.mxu0 0.0
    %473 = vmatprep.mubr.f32.mxu0 0.0
    %474 = vmatmul.mubr.f32.gmra.mrb[0].mxu0 %v404
    %v475 = vpop.f32.mrb[0].mxu0
    %v476 = vadd.f32 0.0, %v475
    %v477 = vpop.f32.mrb[0].mxu0
    %478 = vmatprep.mubr.f32.mxu0 0.0
    %479 = vmatmul.mubr.f32.gmra.mrb[0].mxu0 %v407
    %v480 = vpop.f32.mrb[0].mxu0
    %v481 = vadd.f32 0.0, %v480
    %v482 = vpop.f32.mrb[0].mxu0
    %483 = vdwg.mxu0
    %v484 = vrcp.pop %v391
    %v485 = vrcp.pop %v394
    %v486 = vmul.f32 %v476, %v484
    %v487 = vmul.f32 %v481, %v485
    %490 = vrot.lane.b32.xlu0 %v486, 32
    %v491 = vpop.permute.xlu0 %490
    %492 = vrot.lane.b32.xlu0 %v487, 32
    %v493 = vpop.permute.xlu0 %492
    %vm496 = vcmask 523520
    %497 = vst.msk [vmem:[#allocation7] sm:$0xff] %vm496, %v491
    %498 = vst.msk [vmem:[#allocation7 + $0x8] sm:$0xff] %vm496, %v493
    %v499 = vld [vmem:[#allocation2] sm:$0xff]
    %v500 = vld [vmem:[#allocation2 + $0x8] sm:$0xff]
    %v501 = vld [vmem:[#allocation5] sm:$0xff]
    %v502 = vld [vmem:[#allocation5 + $0x8] sm:$0xff]
    %v503 = vmul.f32 %v501, %v501
    %v504 = vmul.f32 %v502, %v502
    %507 = vrot.lane.b32.xlu0 %v503, 64
    %v508 = vpop.permute.xlu0 %507
    %509 = vrot.lane.b32.xlu0 %v504, 64
    %v510 = vpop.permute.xlu0 %509
    %v513 = vsel %vm46, %v508, 0.0
    %514 = vadd.xlane.f32.xlu0 %v513
    %v515 = vpop.xlane.xlu0 %514
    %v516 = vsel %vm46, %v510, 0.0
    %517 = vadd.xlane.f32.xlu0 %v516
    %v518 = vpop.xlane.xlu0 %517
    %v519 = vmax.f32 %v515, 1e-24
    %v520 = vmax.f32 %v518, 1e-24
    %v521 = vrsqrt.pop %v519
    %v522 = vrsqrt.pop %v520
    %v523 = vmul.f32 %v521, 0.17677669
    %v524 = vmul.f32 %v522, 0.17677669
    %v525 = vmul.f32 %v501, %v523
    %v526 = vmul.f32 %v502, %v524
    %529 = vrot.lane.b32.xlu0 %v499, 64
    %v530 = vpop.permute.xlu0 %529
    %531 = vrot.lane.b32.xlu0 %v500, 64
    %v532 = vpop.permute.xlu0 %531
    %535 = vrot.lane.b32.xlu0 %v525, 64
    %v536 = vpop.permute.xlu0 %535
    %537 = vrot.lane.b32.xlu0 %v526, 64
    %v538 = vpop.permute.xlu0 %537
    %v539 = vsel %vm46, %v530, 0
    %v541 = vsel %vm46, %v532, 0
    %v543 = vsel %vm46, %v536, 0
    %v545 = vsel %vm46, %v538, 0
    %547 = vmatprep.subr.mxu0 0.0
    %548 = vmatpush1.xpose.msra.mxu0 %v543
    %549 = vmatprep.subr.mxu0 0.0
    %550 = vmatpush1.xpose.msra.mxu0 %v545
    %551 = vmatprep.subr.mxu0 0.0
    %552 = vmatpush1.xpose.msra.mxu0 0.0
    %553 = vmatprep.subr.mxu0 0.0
    %554 = vmatpush1.xpose.msra.mxu0 0.0
    %555 = vmatprep.subr.mxu0 0.0
    %556 = vmatpush1.xpose.msra.mxu0 0.0
    %557 = vmatprep.subr.mxu0 0.0
    %558 = vmatpush1.xpose.msra.mxu0 0.0
    %559 = vmatprep.subr.mxu0 0.0
    %560 = vmatpush1.xpose.msra.mxu0 0.0
    %561 = vmatprep.subr.mxu0 0.0
    %562 = vmatpush1.xpose.msra.mxu0 0.0
    %563 = vmatprep.subr.mxu0 0.0
    %564 = vmatpush1.xpose.msra.mxu0 0.0
    %565 = vmatprep.subr.mxu0 0.0
    %566 = vmatpush1.xpose.msra.mxu0 0.0
    %567 = vmatprep.subr.mxu0 0.0
    %568 = vmatpush1.xpose.msra.mxu0 0.0
    %569 = vmatprep.subr.mxu0 0.0
    %570 = vmatpush1.xpose.msra.mxu0 0.0
    %571 = vmatprep.subr.mxu0 0.0
    %572 = vmatpush1.xpose.msra.mxu0 0.0
    %573 = vmatprep.subr.mxu0 0.0
    %574 = vmatpush1.xpose.msra.mxu0 0.0
    %575 = vmatprep.subr.mxu0 0.0
    %576 = vmatpush1.xpose.msra.mxu0 0.0
    %577 = vmatprep.subr.mxu0 0.0
    %578 = vmatpush1.xpose.msra.mxu0 0.0
    %579 = vmatprep.subr.mxu0 0.0
    %580 = vmatpush1.xpose.msra.mxu0 0.0
    %581 = vmatprep.subr.mxu0 0.0
    %582 = vmatpush1.xpose.msra.mxu0 0.0
    %583 = vmatprep.subr.mxu0 0.0
    %584 = vmatpush1.xpose.msra.mxu0 0.0
    %585 = vmatprep.subr.mxu0 0.0
    %586 = vmatpush1.xpose.msra.mxu0 0.0
    %587 = vmatprep.subr.mxu0 0.0
    %588 = vmatpush1.xpose.msra.mxu0 0.0
    %589 = vmatprep.subr.mxu0 0.0
    %590 = vmatpush1.xpose.msra.mxu0 0.0
    %591 = vmatprep.subr.mxu0 0.0
    %592 = vmatpush1.xpose.msra.mxu0 0.0
    %593 = vmatprep.subr.mxu0 0.0
    %594 = vmatpush1.xpose.msra.mxu0 0.0
    %595 = vmatprep.subr.mxu0 0.0
    %596 = vmatpush1.xpose.msra.mxu0 0.0
    %597 = vmatprep.subr.mxu0 0.0
    %598 = vmatpush1.xpose.msra.mxu0 0.0
    %599 = vmatprep.subr.mxu0 0.0
    %600 = vmatpush1.xpose.msra.mxu0 0.0
    %601 = vmatprep.subr.mxu0 0.0
    %602 = vmatpush1.xpose.msra.mxu0 0.0
    %603 = vmatprep.subr.mxu0 0.0
    %604 = vmatpush1.xpose.msra.mxu0 0.0
    %605 = vmatprep.subr.mxu0 0.0
    %606 = vmatpush1.xpose.msra.mxu0 0.0
    %607 = vmatprep.subr.mxu0 0.0
    %608 = vmatpush1.xpose.msra.mxu0 0.0
    %609 = vmatprep.subr.mxu0 0.0
    %610 = vmatpush1.xpose.msra.mxu0 0.0
    %611 = vmatprep.mubr.f32.mxu0 0.0
    %612 = vmatmul.mubr.f32.gmra.mrb[0].mxu0 %v539
    %v613 = vpop.f32.mrb[0].mxu0
    %v614 = vadd.f32 0.0, %v613
    %v615 = vpop.f32.mrb[0].mxu0
    %616 = vmatprep.mubr.f32.mxu0 0.0
    %617 = vmatmul.mubr.f32.gmra.mrb[0].mxu0 %v541
    %v618 = vpop.f32.mrb[0].mxu0
    %v619 = vadd.f32 0.0, %v618
    %v620 = vpop.f32.mrb[0].mxu0
    %621 = vdwg.mxu0
    %v622 = vsel %vm148, %v614, -inf
    %623 = vmax.xlane.f32.xlu0 %v622
    %v624 = vpop.xlane.xlu0 %623
    %v625 = vsel %vm148, %v619, -inf
    %626 = vmax.xlane.f32.xlu0 %v625
    %v627 = vpop.xlane.xlu0 %626
    %v628 = vsub.f32 %v614, %v624
    %v629 = vsub.f32 %v619, %v627
    %v630 = vmul.f32 %v628, 1.442695
    %v631 = vpow.pop %v630
    %v632 = vmul.f32 %v629, 1.442695
    %v633 = vpow.pop %v632
    %v634 = vsel %vm148, %v631, 0.0
    %635 = vadd.xlane.f32.xlu0 %v634
    %v636 = vpop.xlane.xlu0 %635
    %v637 = vsel %vm148, %v633, 0.0
    %638 = vadd.xlane.f32.xlu0 %v637
    %v639 = vpop.xlane.xlu0 %638
    %642 = vrot.lane.b32.xlu0 %v501, 64
    %v643 = vpop.permute.xlu0 %642
    %644 = vrot.lane.b32.xlu0 %v502, 64
    %v645 = vpop.permute.xlu0 %644
    %v649 = vsel %vm148, %v631, 0
    %v652 = vsel %vm148, %v633, 0
    %654 = vmatprep.subr.mxu0 0.0
    %655 = vmatpush1.msra.mxu0 %v643
    %656 = vmatprep.subr.mxu0 0.0
    %657 = vmatpush1.msra.mxu0 %v645
    %658 = vmatprep.subr.mxu0 0.0
    %659 = vmatpush1.msra.mxu0 0.0
    %660 = vmatprep.subr.mxu0 0.0
    %661 = vmatpush1.msra.mxu0 0.0
    %662 = vmatprep.subr.mxu0 0.0
    %663 = vmatpush1.msra.mxu0 0.0
    %664 = vmatprep.subr.mxu0 0.0
    %665 = vmatpush1.msra.mxu0 0.0
    %666 = vmatprep.subr.mxu0 0.0
    %667 = vmatpush1.msra.mxu0 0.0
    %668 = vmatprep.subr.mxu0 0.0
    %669 = vmatpush1.msra.mxu0 0.0
    %670 = vmatprep.subr.mxu0 0.0
    %671 = vmatpush1.msra.mxu0 0.0
    %672 = vmatprep.subr.mxu0 0.0
    %673 = vmatpush1.msra.mxu0 0.0
    %674 = vmatprep.subr.mxu0 0.0
    %675 = vmatpush1.msra.mxu0 0.0
    %676 = vmatprep.subr.mxu0 0.0
    %677 = vmatpush1.msra.mxu0 0.0
    %678 = vmatprep.subr.mxu0 0.0
    %679 = vmatpush1.msra.mxu0 0.0
    %680 = vmatprep.subr.mxu0 0.0
    %681 = vmatpush1.msra.mxu0 0.0
    %682 = vmatprep.subr.mxu0 0.0
    %683 = vmatpush1.msra.mxu0 0.0
    %684 = vmatprep.subr.mxu0 0.0
    %685 = vmatpush1.msra.mxu0 0.0
    %686 = vmatprep.subr.mxu0 0.0
    %687 = vmatpush1.msra.mxu0 0.0
    %688 = vmatprep.subr.mxu0 0.0
    %689 = vmatpush1.msra.mxu0 0.0
    %690 = vmatprep.subr.mxu0 0.0
    %691 = vmatpush1.msra.mxu0 0.0
    %692 = vmatprep.subr.mxu0 0.0
    %693 = vmatpush1.msra.mxu0 0.0
    %694 = vmatprep.subr.mxu0 0.0
    %695 = vmatpush1.msra.mxu0 0.0
    %696 = vmatprep.subr.mxu0 0.0
    %697 = vmatpush1.msra.mxu0 0.0
    %698 = vmatprep.subr.mxu0 0.0
    %699 = vmatpush1.msra.mxu0 0.0
    %700 = vmatprep.subr.mxu0 0.0
    %701 = vmatpush1.msra.mxu0 0.0
    %702 = vmatprep.subr.mxu0 0.0
    %703 = vmatpush1.msra.mxu0 0.0
    %704 = vmatprep.subr.mxu0 0.0
    %705 = vmatpush1.msra.mxu0 0.0
    %706 = vmatprep.subr.mxu0 0.0
    %707 = vmatpush1.msra.mxu0 0.0
    %708 = vmatprep.subr.mxu0 0.0
    %709 = vmatpush1.msra.mxu0 0.0
    %710 = vmatprep.subr.mxu0 0.0
    %711 = vmatpush1.msra.mxu0 0.0
    %712 = vmatprep.subr.mxu0 0.0
    %713 = vmatpush1.msra.mxu0 0.0
    %714 = vmatprep.subr.mxu0 0.0
    %715 = vmatpush1.msra.mxu0 0.0
    %716 = vmatprep.subr.mxu0 0.0
    %717 = vmatpush1.msra.mxu0 0.0
    %718 = vmatprep.mubr.f32.mxu0 0.0
    %719 = vmatmul.mubr.f32.gmra.mrb[0].mxu0 %v649
    %v720 = vpop.f32.mrb[0].mxu0
    %v721 = vadd.f32 0.0, %v720
    %v722 = vpop.f32.mrb[0].mxu0
    %723 = vmatprep.mubr.f32.mxu0 0.0
    %724 = vmatmul.mubr.f32.gmra.mrb[0].mxu0 %v652
    %v725 = vpop.f32.mrb[0].mxu0
    %v726 = vadd.f32 0.0, %v725
    %v727 = vpop.f32.mrb[0].mxu0
    %728 = vdwg.mxu0
    %v729 = vrcp.pop %v636
    %v730 = vrcp.pop %v639
    %v731 = vmul.f32 %v721, %v729
    %v732 = vmul.f32 %v726, %v730
    %735 = vrot.lane.b32.xlu0 %v731, 64
    %v736 = vpop.permute.xlu0 %735
    %737 = vrot.lane.b32.xlu0 %v732, 64
    %v738 = vpop.permute.xlu0 %737
    %vm741 = vcmask 785920
    %742 = vst.msk [vmem:[#allocation7] sm:$0xff] %vm741, %v736
    %743 = vst.msk [vmem:[#allocation7 + $0x8] sm:$0xff] %vm741, %v738
    %v744 = vld [vmem:[#allocation2] sm:$0xff]
    %v745 = vld [vmem:[#allocation2 + $0x8] sm:$0xff]
    %v746 = vld [vmem:[#allocation5] sm:$0xff]
    %v747 = vld [vmem:[#allocation5 + $0x8] sm:$0xff]
    %v748 = vmul.f32 %v746, %v746
    %v749 = vmul.f32 %v747, %v747
    %752 = vrot.lane.b32.xlu0 %v748, 32
    %v753 = vpop.permute.xlu0 %752
    %754 = vrot.lane.b32.xlu0 %v749, 32
    %v755 = vpop.permute.xlu0 %754
    %v758 = vsel %vm46, %v753, 0.0
    %759 = vadd.xlane.f32.xlu0 %v758
    %v760 = vpop.xlane.xlu0 %759
    %v761 = vsel %vm46, %v755, 0.0
    %762 = vadd.xlane.f32.xlu0 %v761
    %v763 = vpop.xlane.xlu0 %762
    %v764 = vmax.f32 %v760, 1e-24
    %v765 = vmax.f32 %v763, 1e-24
    %v766 = vrsqrt.pop %v764
    %v767 = vrsqrt.pop %v765
    %v768 = vmul.f32 %v766, 0.17677669
    %v769 = vmul.f32 %v767, 0.17677669
    %v770 = vmul.f32 %v746, %v768
    %v771 = vmul.f32 %v747, %v769
    %774 = vrot.lane.b32.xlu0 %v744, 32
    %v775 = vpop.permute.xlu0 %774
    %776 = vrot.lane.b32.xlu0 %v745, 32
    %v777 = vpop.permute.xlu0 %776
    %780 = vrot.lane.b32.xlu0 %v770, 32
    %v781 = vpop.permute.xlu0 %780
    %782 = vrot.lane.b32.xlu0 %v771, 32
    %v783 = vpop.permute.xlu0 %782
    %v784 = vsel %vm46, %v775, 0
    %v786 = vsel %vm46, %v777, 0
    %v788 = vsel %vm46, %v781, 0
    %v790 = vsel %vm46, %v783, 0
    %792 = vmatprep.subr.mxu0 0.0
    %793 = vmatpush1.xpose.msra.mxu0 %v788
    %794 = vmatprep.subr.mxu0 0.0
    %795 = vmatpush1.xpose.msra.mxu0 %v790
    %796 = vmatprep.subr.mxu0 0.0
    %797 = vmatpush1.xpose.msra.mxu0 0.0
    %798 = vmatprep.subr.mxu0 0.0
    %799 = vmatpush1.xpose.msra.mxu0 0.0
    %800 = vmatprep.subr.mxu0 0.0
    %801 = vmatpush1.xpose.msra.mxu0 0.0
    %802 = vmatprep.subr.mxu0 0.0
    %803 = vmatpush1.xpose.msra.mxu0 0.0
    %804 = vmatprep.subr.mxu0 0.0
    %805 = vmatpush1.xpose.msra.mxu0 0.0
    %806 = vmatprep.subr.mxu0 0.0
    %807 = vmatpush1.xpose.msra.mxu0 0.0
    %808 = vmatprep.subr.mxu0 0.0
    %809 = vmatpush1.xpose.msra.mxu0 0.0
    %810 = vmatprep.subr.mxu0 0.0
    %811 = vmatpush1.xpose.msra.mxu0 0.0
    %812 = vmatprep.subr.mxu0 0.0
    %813 = vmatpush1.xpose.msra.mxu0 0.0
    %814 = vmatprep.subr.mxu0 0.0
    %815 = vmatpush1.xpose.msra.mxu0 0.0
    %816 = vmatprep.subr.mxu0 0.0
    %817 = vmatpush1.xpose.msra.mxu0 0.0
    %818 = vmatprep.subr.mxu0 0.0
    %819 = vmatpush1.xpose.msra.mxu0 0.0
    %820 = vmatprep.subr.mxu0 0.0
    %821 = vmatpush1.xpose.msra.mxu0 0.0
    %822 = vmatprep.subr.mxu0 0.0
    %823 = vmatpush1.xpose.msra.mxu0 0.0
    %824 = vmatprep.subr.mxu0 0.0
    %825 = vmatpush1.xpose.msra.mxu0 0.0
    %826 = vmatprep.subr.mxu0 0.0
    %827 = vmatpush1.xpose.msra.mxu0 0.0
    %828 = vmatprep.subr.mxu0 0.0
    %829 = vmatpush1.xpose.msra.mxu0 0.0
    %830 = vmatprep.subr.mxu0 0.0
    %831 = vmatpush1.xpose.msra.mxu0 0.0
    %832 = vmatprep.subr.mxu0 0.0
    %833 = vmatpush1.xpose.msra.mxu0 0.0
    %834 = vmatprep.subr.mxu0 0.0
    %835 = vmatpush1.xpose.msra.mxu0 0.0
    %836 = vmatprep.subr.mxu0 0.0
    %837 = vmatpush1.xpose.msra.mxu0 0.0
    %838 = vmatprep.subr.mxu0 0.0
    %839 = vmatpush1.xpose.msra.mxu0 0.0
    %840 = vmatprep.subr.mxu0 0.0
    %841 = vmatpush1.xpose.msra.mxu0 0.0
    %842 = vmatprep.subr.mxu0 0.0
    %843 = vmatpush1.xpose.msra.mxu0 0.0
    %844 = vmatprep.subr.mxu0 0.0
    %845 = vmatpush1.xpose.msra.mxu0 0.0
    %846 = vmatprep.subr.mxu0 0.0
    %847 = vmatpush1.xpose.msra.mxu0 0.0
    %848 = vmatprep.subr.mxu0 0.0
    %849 = vmatpush1.xpose.msra.mxu0 0.0
    %850 = vmatprep.subr.mxu0 0.0
    %851 = vmatpush1.xpose.msra.mxu0 0.0
    %852 = vmatprep.subr.mxu0 0.0
    %853 = vmatpush1.xpose.msra.mxu0 0.0
    %854 = vmatprep.subr.mxu0 0.0
    %855 = vmatpush1.xpose.msra.mxu0 0.0
    %856 = vmatprep.mubr.f32.mxu0 0.0
    %857 = vmatmul.mubr.f32.gmra.mrb[0].mxu0 %v784
    %v858 = vpop.f32.mrb[0].mxu0
    %v859 = vadd.f32 0.0, %v858
    %v860 = vpop.f32.mrb[0].mxu0
    %861 = vmatprep.mubr.f32.mxu0 0.0
    %862 = vmatmul.mubr.f32.gmra.mrb[0].mxu0 %v786
    %v863 = vpop.f32.mrb[0].mxu0
    %v864 = vadd.f32 0.0, %v863
    %v865 = vpop.f32.mrb[0].mxu0
    %866 = vdwg.mxu0
    %v867 = vsel %vm148, %v859, -inf
    %868 = vmax.xlane.f32.xlu0 %v867
    %v869 = vpop.xlane.xlu0 %868
    %v870 = vsel %vm148, %v864, -inf
    %871 = vmax.xlane.f32.xlu0 %v870
    %v872 = vpop.xlane.xlu0 %871
    %v873 = vsub.f32 %v859, %v869
    %v874 = vsub.f32 %v864, %v872
    %v875 = vmul.f32 %v873, 1.442695
    %v876 = vpow.pop %v875
    %v877 = vmul.f32 %v874, 1.442695
    %v878 = vpow.pop %v877
    %v879 = vsel %vm148, %v876, 0.0
    %880 = vadd.xlane.f32.xlu0 %v879
    %v881 = vpop.xlane.xlu0 %880
    %v882 = vsel %vm148, %v878, 0.0
    %883 = vadd.xlane.f32.xlu0 %v882
    %v884 = vpop.xlane.xlu0 %883
    %887 = vrot.lane.b32.xlu0 %v746, 32
    %v888 = vpop.permute.xlu0 %887
    %889 = vrot.lane.b32.xlu0 %v747, 32
    %v890 = vpop.permute.xlu0 %889
    %v894 = vsel %vm148, %v876, 0
    %v897 = vsel %vm148, %v878, 0
    %899 = vmatprep.subr.mxu0 0.0
    %900 = vmatpush1.msra.mxu0 %v888
    %901 = vmatprep.subr.mxu0 0.0
    %902 = vmatpush1.msra.mxu0 %v890
    %903 = vmatprep.subr.mxu0 0.0
    %904 = vmatpush1.msra.mxu0 0.0
    %905 = vmatprep.subr.mxu0 0.0
    %906 = vmatpush1.msra.mxu0 0.0
    %907 = vmatprep.subr.mxu0 0.0
    %908 = vmatpush1.msra.mxu0 0.0
    %909 = vmatprep.subr.mxu0 0.0
    %910 = vmatpush1.msra.mxu0 0.0
    %911 = vmatprep.subr.mxu0 0.0
    %912 = vmatpush1.msra.mxu0 0.0
    %913 = vmatprep.subr.mxu0 0.0
    %914 = vmatpush1.msra.mxu0 0.0
    %915 = vmatprep.subr.mxu0 0.0
    %916 = vmatpush1.msra.mxu0 0.0
    %917 = vmatprep.subr.mxu0 0.0
    %918 = vmatpush1.msra.mxu0 0.0
    %919 = vmatprep.subr.mxu0 0.0
    %920 = vmatpush1.msra.mxu0 0.0
    %921 = vmatprep.subr.mxu0 0.0
    %922 = vmatpush1.msra.mxu0 0.0
    %923 = vmatprep.subr.mxu0 0.0
    %924 = vmatpush1.msra.mxu0 0.0
    %925 = vmatprep.subr.mxu0 0.0
    %926 = vmatpush1.msra.mxu0 0.0
    %927 = vmatprep.subr.mxu0 0.0
    %928 = vmatpush1.msra.mxu0 0.0
    %929 = vmatprep.subr.mxu0 0.0
    %930 = vmatpush1.msra.mxu0 0.0
    %931 = vmatprep.subr.mxu0 0.0
    %932 = vmatpush1.msra.mxu0 0.0
    %933 = vmatprep.subr.mxu0 0.0
    %934 = vmatpush1.msra.mxu0 0.0
    %935 = vmatprep.subr.mxu0 0.0
    %936 = vmatpush1.msra.mxu0 0.0
    %937 = vmatprep.subr.mxu0 0.0
    %938 = vmatpush1.msra.mxu0 0.0
    %939 = vmatprep.subr.mxu0 0.0
    %940 = vmatpush1.msra.mxu0 0.0
    %941 = vmatprep.subr.mxu0 0.0
    %942 = vmatpush1.msra.mxu0 0.0
    %943 = vmatprep.subr.mxu0 0.0
    %944 = vmatpush1.msra.mxu0 0.0
    %945 = vmatprep.subr.mxu0 0.0
    %946 = vmatpush1.msra.mxu0 0.0
    %947 = vmatprep.subr.mxu0 0.0
    %948 = vmatpush1.msra.mxu0 0.0
    %949 = vmatprep.subr.mxu0 0.0
    %950 = vmatpush1.msra.mxu0 0.0
    %951 = vmatprep.subr.mxu0 0.0
    %952 = vmatpush1.msra.mxu0 0.0
    %953 = vmatprep.subr.mxu0 0.0
    %954 = vmatpush1.msra.mxu0 0.0
    %955 = vmatprep.subr.mxu0 0.0
    %956 = vmatpush1.msra.mxu0 0.0
    %957 = vmatprep.subr.mxu0 0.0
    %958 = vmatpush1.msra.mxu0 0.0
    %959 = vmatprep.subr.mxu0 0.0
    %960 = vmatpush1.msra.mxu0 0.0
    %961 = vmatprep.subr.mxu0 0.0
    %962 = vmatpush1.msra.mxu0 0.0
    %963 = vmatprep.mubr.f32.mxu0 0.0
    %964 = vmatmul.mubr.f32.gmra.mrb[0].mxu0 %v894
    %v965 = vpop.f32.mrb[0].mxu0
    %v966 = vadd.f32 0.0, %v965
    %v967 = vpop.f32.mrb[0].mxu0
    %968 = vmatprep.mubr.f32.mxu0 0.0
    %969 = vmatmul.mubr.f32.gmra.mrb[0].mxu0 %v897
    %v970 = vpop.f32.mrb[0].mxu0
    %v971 = vadd.f32 0.0, %v970
    %v972 = vpop.f32.mrb[0].mxu0
    %973 = vdwg.mxu0
    %v974 = vrcp.pop %v881
    %v975 = vrcp.pop %v884
    %v976 = vmul.f32 %v966, %v974
    %v977 = vmul.f32 %v971, %v975
    %980 = vrot.lane.b32.xlu0 %v976, 96
    %v981 = vpop.permute.xlu0 %980
    %982 = vrot.lane.b32.xlu0 %v977, 96
    %v983 = vpop.permute.xlu0 %982
    %vm986 = vcmask 1048320
    %987 = vst.msk [vmem:[#allocation7] sm:$0xff] %vm986, %v981
    %988 = vst.msk [vmem:[#allocation7 + $0x8] sm:$0xff] %vm986, %v983
    %s989 = scalar_lea.vmem [#allocation2], 16
    %v990 = vld [vmem:[%s989] sm:$0xff]
    %v991 = vld [vmem:[%s989 + $0x8] sm:$0xff]
    %s992 = scalar_lea.vmem [#allocation5], 16
    %v993 = vld [vmem:[%s992] sm:$0xff]
    %v994 = vld [vmem:[%s992 + $0x8] sm:$0xff]
    %v995 = vmul.f32 %v993, %v993
    %v996 = vmul.f32 %v994, %v994
    %v997 = vsel %vm46, %v995, 0.0
    %998 = vadd.xlane.f32.xlu0 %v997
    %v999 = vpop.xlane.xlu0 %998
    %v1000 = vsel %vm46, %v996, 0.0
    %1001 = vadd.xlane.f32.xlu0 %v1000
    %v1002 = vpop.xlane.xlu0 %1001
    %v1003 = vmax.f32 %v999, 1e-24
    %v1004 = vmax.f32 %v1002, 1e-24
    %v1005 = vrsqrt.pop %v1003
    %v1006 = vrsqrt.pop %v1004
    %v1007 = vmul.f32 %v1005, 0.17677669
    %v1008 = vmul.f32 %v1006, 0.17677669
    %v1009 = vmul.f32 %v993, %v1007
    %v1010 = vmul.f32 %v994, %v1008
    %v1012 = vsel %vm46, %v990, 0
    %v1015 = vsel %vm46, %v991, 0
    %v1018 = vsel %vm46, %v1009, 0
    %v1021 = vsel %vm46, %v1010, 0
    %1023 = vmatprep.subr.mxu0 0.0
    %1024 = vmatpush1.xpose.msra.mxu0 %v1018
    %1025 = vmatprep.subr.mxu0 0.0
    %1026 = vmatpush1.xpose.msra.mxu0 %v1021
    %1027 = vmatprep.subr.mxu0 0.0
    %1028 = vmatpush1.xpose.msra.mxu0 0.0
    %1029 = vmatprep.subr.mxu0 0.0
    %1030 = vmatpush1.xpose.msra.mxu0 0.0
    %1031 = vmatprep.subr.mxu0 0.0
    %1032 = vmatpush1.xpose.msra.mxu0 0.0
    %1033 = vmatprep.subr.mxu0 0.0
    %1034 = vmatpush1.xpose.msra.mxu0 0.0
    %1035 = vmatprep.subr.mxu0 0.0
    %1036 = vmatpush1.xpose.msra.mxu0 0.0
    %1037 = vmatprep.subr.mxu0 0.0
    %1038 = vmatpush1.xpose.msra.mxu0 0.0
    %1039 = vmatprep.subr.mxu0 0.0
    %1040 = vmatpush1.xpose.msra.mxu0 0.0
    %1041 = vmatprep.subr.mxu0 0.0
    %1042 = vmatpush1.xpose.msra.mxu0 0.0
    %1043 = vmatprep.subr.mxu0 0.0
    %1044 = vmatpush1.xpose.msra.mxu0 0.0
    %1045 = vmatprep.subr.mxu0 0.0
    %1046 = vmatpush1.xpose.msra.mxu0 0.0
    %1047 = vmatprep.subr.mxu0 0.0
    %1048 = vmatpush1.xpose.msra.mxu0 0.0
    %1049 = vmatprep.subr.mxu0 0.0
    %1050 = vmatpush1.xpose.msra.mxu0 0.0
    %1051 = vmatprep.subr.mxu0 0.0
    %1052 = vmatpush1.xpose.msra.mxu0 0.0
    %1053 = vmatprep.subr.mxu0 0.0
    %1054 = vmatpush1.xpose.msra.mxu0 0.0
    %1055 = vmatprep.subr.mxu0 0.0
    %1056 = vmatpush1.xpose.msra.mxu0 0.0
    %1057 = vmatprep.subr.mxu0 0.0
    %1058 = vmatpush1.xpose.msra.mxu0 0.0
    %1059 = vmatprep.subr.mxu0 0.0
    %1060 = vmatpush1.xpose.msra.mxu0 0.0
    %1061 = vmatprep.subr.mxu0 0.0
    %1062 = vmatpush1.xpose.msra.mxu0 0.0
    %1063 = vmatprep.subr.mxu0 0.0
    %1064 = vmatpush1.xpose.msra.mxu0 0.0
    %1065 = vmatprep.subr.mxu0 0.0
    %1066 = vmatpush1.xpose.msra.mxu0 0.0
    %1067 = vmatprep.subr.mxu0 0.0
    %1068 = vmatpush1.xpose.msra.mxu0 0.0
    %1069 = vmatprep.subr.mxu0 0.0
    %1070 = vmatpush1.xpose.msra.mxu0 0.0
    %1071 = vmatprep.subr.mxu0 0.0
    %1072 = vmatpush1.xpose.msra.mxu0 0.0
    %1073 = vmatprep.subr.mxu0 0.0
    %1074 = vmatpush1.xpose.msra.mxu0 0.0
    %1075 = vmatprep.subr.mxu0 0.0
    %1076 = vmatpush1.xpose.msra.mxu0 0.0
    %1077 = vmatprep.subr.mxu0 0.0
    %1078 = vmatpush1.xpose.msra.mxu0 0.0
    %1079 = vmatprep.subr.mxu0 0.0
    %1080 = vmatpush1.xpose.msra.mxu0 0.0
    %1081 = vmatprep.subr.mxu0 0.0
    %1082 = vmatpush1.xpose.msra.mxu0 0.0
    %1083 = vmatprep.subr.mxu0 0.0
    %1084 = vmatpush1.xpose.msra.mxu0 0.0
    %1085 = vmatprep.subr.mxu0 0.0
    %1086 = vmatpush1.xpose.msra.mxu0 0.0
    %1087 = vmatprep.mubr.f32.mxu0 0.0
    %1088 = vmatmul.mubr.f32.gmra.mrb[0].mxu0 %v1012
    %v1089 = vpop.f32.mrb[0].mxu0
    %v1090 = vadd.f32 0.0, %v1089
    %v1091 = vpop.f32.mrb[0].mxu0
    %1092 = vmatprep.mubr.f32.mxu0 0.0
    %1093 = vmatmul.mubr.f32.gmra.mrb[0].mxu0 %v1015
    %v1094 = vpop.f32.mrb[0].mxu0
    %v1095 = vadd.f32 0.0, %v1094
    %v1096 = vpop.f32.mrb[0].mxu0
    %1097 = vdwg.mxu0
    %v1098 = vsel %vm148, %v1090, -inf
    %1099 = vmax.xlane.f32.xlu0 %v1098
    %v1100 = vpop.xlane.xlu0 %1099
    %v1101 = vsel %vm148, %v1095, -inf
    %1102 = vmax.xlane.f32.xlu0 %v1101
    %v1103 = vpop.xlane.xlu0 %1102
    %v1104 = vsub.f32 %v1090, %v1100
    %v1105 = vsub.f32 %v1095, %v1103
    %v1106 = vmul.f32 %v1104, 1.442695
    %v1107 = vpow.pop %v1106
    %v1108 = vmul.f32 %v1105, 1.442695
    %v1109 = vpow.pop %v1108
    %v1110 = vsel %vm148, %v1107, 0.0
    %1111 = vadd.xlane.f32.xlu0 %v1110
    %v1112 = vpop.xlane.xlu0 %1111
    %v1113 = vsel %vm148, %v1109, 0.0
    %1114 = vadd.xlane.f32.xlu0 %v1113
    %v1115 = vpop.xlane.xlu0 %1114
    %v1117 = vsel %vm148, %v1107, 0
    %v1120 = vsel %vm148, %v1109, 0
    %1122 = vmatprep.subr.mxu0 0.0
    %1123 = vmatpush1.msra.mxu0 %v993
    %1124 = vmatprep.subr.mxu0 0.0
    %1125 = vmatpush1.msra.mxu0 %v994
    %1126 = vmatprep.subr.mxu0 0.0
    %1127 = vmatpush1.msra.mxu0 0.0
    %1128 = vmatprep.subr.mxu0 0.0
    %1129 = vmatpush1.msra.mxu0 0.0
    %1130 = vmatprep.subr.mxu0 0.0
    %1131 = vmatpush1.msra.mxu0 0.0
    %1132 = vmatprep.subr.mxu0 0.0
    %1133 = vmatpush1.msra.mxu0 0.0
    %1134 = vmatprep.subr.mxu0 0.0
    %1135 = vmatpush1.msra.mxu0 0.0
    %1136 = vmatprep.subr.mxu0 0.0
    %1137 = vmatpush1.msra.mxu0 0.0
    %1138 = vmatprep.subr.mxu0 0.0
    %1139 = vmatpush1.msra.mxu0 0.0
    %1140 = vmatprep.subr.mxu0 0.0
    %1141 = vmatpush1.msra.mxu0 0.0
    %1142 = vmatprep.subr.mxu0 0.0
    %1143 = vmatpush1.msra.mxu0 0.0
    %1144 = vmatprep.subr.mxu0 0.0
    %1145 = vmatpush1.msra.mxu0 0.0
    %1146 = vmatprep.subr.mxu0 0.0
    %1147 = vmatpush1.msra.mxu0 0.0
    %1148 = vmatprep.subr.mxu0 0.0
    %1149 = vmatpush1.msra.mxu0 0.0
    %1150 = vmatprep.subr.mxu0 0.0
    %1151 = vmatpush1.msra.mxu0 0.0
    %1152 = vmatprep.subr.mxu0 0.0
    %1153 = vmatpush1.msra.mxu0 0.0
    %1154 = vmatprep.subr.mxu0 0.0
    %1155 = vmatpush1.msra.mxu0 0.0
    %1156 = vmatprep.subr.mxu0 0.0
    %1157 = vmatpush1.msra.mxu0 0.0
    %1158 = vmatprep.subr.mxu0 0.0
    %1159 = vmatpush1.msra.mxu0 0.0
    %1160 = vmatprep.subr.mxu0 0.0
    %1161 = vmatpush1.msra.mxu0 0.0
    %1162 = vmatprep.subr.mxu0 0.0
    %1163 = vmatpush1.msra.mxu0 0.0
    %1164 = vmatprep.subr.mxu0 0.0
    %1165 = vmatpush1.msra.mxu0 0.0
    %1166 = vmatprep.subr.mxu0 0.0
    %1167 = vmatpush1.msra.mxu0 0.0
    %1168 = vmatprep.subr.mxu0 0.0
    %1169 = vmatpush1.msra.mxu0 0.0
    %1170 = vmatprep.subr.mxu0 0.0
    %1171 = vmatpush1.msra.mxu0 0.0
    %1172 = vmatprep.subr.mxu0 0.0
    %1173 = vmatpush1.msra.mxu0 0.0
    %1174 = vmatprep.subr.mxu0 0.0
    %1175 = vmatpush1.msra.mxu0 0.0
    %1176 = vmatprep.subr.mxu0 0.0
    %1177 = vmatpush1.msra.mxu0 0.0
    %1178 = vmatprep.subr.mxu0 0.0
    %1179 = vmatpush1.msra.mxu0 0.0
    %1180 = vmatprep.subr.mxu0 0.0
    %1181 = vmatpush1.msra.mxu0 0.0
    %1182 = vmatprep.subr.mxu0 0.0
    %1183 = vmatpush1.msra.mxu0 0.0
    %1184 = vmatprep.subr.mxu0 0.0
    %1185 = vmatpush1.msra.mxu0 0.0
    %1186 = vmatprep.mubr.f32.mxu0 0.0
    %1187 = vmatmul.mubr.f32.gmra.mrb[0].mxu0 %v1117
    %v1188 = vpop.f32.mrb[0].mxu0
    %v1189 = vadd.f32 0.0, %v1188
    %v1190 = vpop.f32.mrb[0].mxu0
    %1191 = vmatprep.mubr.f32.mxu0 0.0
    %1192 = vmatmul.mubr.f32.gmra.mrb[0].mxu0 %v1120
    %v1193 = vpop.f32.mrb[0].mxu0
    %v1194 = vadd.f32 0.0, %v1193
    %v1195 = vpop.f32.mrb[0].mxu0
    %1196 = vdwg.mxu0
    %v1197 = vrcp.pop %v1112
    %v1198 = vrcp.pop %v1115
    %v1199 = vmul.f32 %v1189, %v1197
    %v1200 = vmul.f32 %v1194, %v1198
    %s1201 = scalar_lea.vmem [#allocation7], 16
    %1202 = vst.msk [vmem:[%s1201] sm:$0xff] %vm46, %v1199
    %1203 = vst.msk [vmem:[%s1201 + $0x8] sm:$0xff] %vm46, %v1200
    %v1204 = vld [vmem:[%s989] sm:$0xff]
    %v1205 = vld [vmem:[%s989 + $0x8] sm:$0xff]
    %v1206 = vld [vmem:[%s992] sm:$0xff]
    %v1207 = vld [vmem:[%s992 + $0x8] sm:$0xff]
    %v1208 = vmul.f32 %v1206, %v1206
    %v1209 = vmul.f32 %v1207, %v1207
    %1212 = vrot.lane.b32.xlu0 %v1208, 96
    %v1213 = vpop.permute.xlu0 %1212
    %1214 = vrot.lane.b32.xlu0 %v1209, 96
    %v1215 = vpop.permute.xlu0 %1214
    %v1218 = vsel %vm46, %v1213, 0.0
    %1219 = vadd.xlane.f32.xlu0 %v1218
    %v1220 = vpop.xlane.xlu0 %1219
    %v1221 = vsel %vm46, %v1215, 0.0
    %1222 = vadd.xlane.f32.xlu0 %v1221
    %v1223 = vpop.xlane.xlu0 %1222
    %v1224 = vmax.f32 %v1220, 1e-24
    %v1225 = vmax.f32 %v1223, 1e-24
    %v1226 = vrsqrt.pop %v1224
    %v1227 = vrsqrt.pop %v1225
    %v1228 = vmul.f32 %v1226, 0.17677669
    %v1229 = vmul.f32 %v1227, 0.17677669
    %v1230 = vmul.f32 %v1206, %v1228
    %v1231 = vmul.f32 %v1207, %v1229
    %1234 = vrot.lane.b32.xlu0 %v1204, 96
    %v1235 = vpop.permute.xlu0 %1234
    %1236 = vrot.lane.b32.xlu0 %v1205, 96
    %v1237 = vpop.permute.xlu0 %1236
    %1240 = vrot.lane.b32.xlu0 %v1230, 96
    %v1241 = vpop.permute.xlu0 %1240
    %1242 = vrot.lane.b32.xlu0 %v1231, 96
    %v1243 = vpop.permute.xlu0 %1242
    %v1244 = vsel %vm46, %v1235, 0
    %v1246 = vsel %vm46, %v1237, 0
    %v1248 = vsel %vm46, %v1241, 0
    %v1250 = vsel %vm46, %v1243, 0
    %1252 = vmatprep.subr.mxu0 0.0
    %1253 = vmatpush1.xpose.msra.mxu0 %v1248
    %1254 = vmatprep.subr.mxu0 0.0
    %1255 = vmatpush1.xpose.msra.mxu0 %v1250
    %1256 = vmatprep.subr.mxu0 0.0
    %1257 = vmatpush1.xpose.msra.mxu0 0.0
    %1258 = vmatprep.subr.mxu0 0.0
    %1259 = vmatpush1.xpose.msra.mxu0 0.0
    %1260 = vmatprep.subr.mxu0 0.0
    %1261 = vmatpush1.xpose.msra.mxu0 0.0
    %1262 = vmatprep.subr.mxu0 0.0
    %1263 = vmatpush1.xpose.msra.mxu0 0.0
    %1264 = vmatprep.subr.mxu0 0.0
    %1265 = vmatpush1.xpose.msra.mxu0 0.0
    %1266 = vmatprep.subr.mxu0 0.0
    %1267 = vmatpush1.xpose.msra.mxu0 0.0
    %1268 = vmatprep.subr.mxu0 0.0
    %1269 = vmatpush1.xpose.msra.mxu0 0.0
    %1270 = vmatprep.subr.mxu0 0.0
    %1271 = vmatpush1.xpose.msra.mxu0 0.0
    %1272 = vmatprep.subr.mxu0 0.0
    %1273 = vmatpush1.xpose.msra.mxu0 0.0
    %1274 = vmatprep.subr.mxu0 0.0
    %1275 = vmatpush1.xpose.msra.mxu0 0.0
    %1276 = vmatprep.subr.mxu0 0.0
    %1277 = vmatpush1.xpose.msra.mxu0 0.0
    %1278 = vmatprep.subr.mxu0 0.0
    %1279 = vmatpush1.xpose.msra.mxu0 0.0
    %1280 = vmatprep.subr.mxu0 0.0
    %1281 = vmatpush1.xpose.msra.mxu0 0.0
    %1282 = vmatprep.subr.mxu0 0.0
    %1283 = vmatpush1.xpose.msra.mxu0 0.0
    %1284 = vmatprep.subr.mxu0 0.0
    %1285 = vmatpush1.xpose.msra.mxu0 0.0
    %1286 = vmatprep.subr.mxu0 0.0
    %1287 = vmatpush1.xpose.msra.mxu0 0.0
    %1288 = vmatprep.subr.mxu0 0.0
    %1289 = vmatpush1.xpose.msra.mxu0 0.0
    %1290 = vmatprep.subr.mxu0 0.0
    %1291 = vmatpush1.xpose.msra.mxu0 0.0
    %1292 = vmatprep.subr.mxu0 0.0
    %1293 = vmatpush1.xpose.msra.mxu0 0.0
    %1294 = vmatprep.subr.mxu0 0.0
    %1295 = vmatpush1.xpose.msra.mxu0 0.0
    %1296 = vmatprep.subr.mxu0 0.0
    %1297 = vmatpush1.xpose.msra.mxu0 0.0
    %1298 = vmatprep.subr.mxu0 0.0
    %1299 = vmatpush1.xpose.msra.mxu0 0.0
    %1300 = vmatprep.subr.mxu0 0.0
    %1301 = vmatpush1.xpose.msra.mxu0 0.0
    %1302 = vmatprep.subr.mxu0 0.0
    %1303 = vmatpush1.xpose.msra.mxu0 0.0
    %1304 = vmatprep.subr.mxu0 0.0
    %1305 = vmatpush1.xpose.msra.mxu0 0.0
    %1306 = vmatprep.subr.mxu0 0.0
    %1307 = vmatpush1.xpose.msra.mxu0 0.0
    %1308 = vmatprep.subr.mxu0 0.0
    %1309 = vmatpush1.xpose.msra.mxu0 0.0
    %1310 = vmatprep.subr.mxu0 0.0
    %1311 = vmatpush1.xpose.msra.mxu0 0.0
    %1312 = vmatprep.subr.mxu0 0.0
    %1313 = vmatpush1.xpose.msra.mxu0 0.0
    %1314 = vmatprep.subr.mxu0 0.0
    %1315 = vmatpush1.xpose.msra.mxu0 0.0
    %1316 = vmatprep.mubr.f32.mxu0 0.0
    %1317 = vmatmul.mubr.f32.gmra.mrb[0].mxu0 %v1244
    %v1318 = vpop.f32.mrb[0].mxu0
    %v1319 = vadd.f32 0.0, %v1318
    %v1320 = vpop.f32.mrb[0].mxu0
    %1321 = vmatprep.mubr.f32.mxu0 0.0
    %1322 = vmatmul.mubr.f32.gmra.mrb[0].mxu0 %v1246
    %v1323 = vpop.f32.mrb[0].mxu0
    %v1324 = vadd.f32 0.0, %v1323
    %v1325 = vpop.f32.mrb[0].mxu0
    %1326 = vdwg.mxu0
    %v1327 = vsel %vm148, %v1319, -inf
    %1328 = vmax.xlane.f32.xlu0 %v1327
    %v1329 = vpop.xlane.xlu0 %1328
    %v1330 = vsel %vm148, %v1324, -inf
    %1331 = vmax.xlane.f32.xlu0 %v1330
    %v1332 = vpop.xlane.xlu0 %1331
    %v1333 = vsub.f32 %v1319, %v1329
    %v1334 = vsub.f32 %v1324, %v1332
    %v1335 = vmul.f32 %v1333, 1.442695
    %v1336 = vpow.pop %v1335
    %v1337 = vmul.f32 %v1334, 1.442695
    %v1338 = vpow.pop %v1337
    %v1339 = vsel %vm148, %v1336, 0.0
    %1340 = vadd.xlane.f32.xlu0 %v1339
    %v1341 = vpop.xlane.xlu0 %1340
    %v1342 = vsel %vm148, %v1338, 0.0
    %1343 = vadd.xlane.f32.xlu0 %v1342
    %v1344 = vpop.xlane.xlu0 %1343
    %1347 = vrot.lane.b32.xlu0 %v1206, 96
    %v1348 = vpop.permute.xlu0 %1347
    %1349 = vrot.lane.b32.xlu0 %v1207, 96
    %v1350 = vpop.permute.xlu0 %1349
    %v1354 = vsel %vm148, %v1336, 0
    %v1357 = vsel %vm148, %v1338, 0
    %1359 = vmatprep.subr.mxu0 0.0
    %1360 = vmatpush1.msra.mxu0 %v1348
    %1361 = vmatprep.subr.mxu0 0.0
    %1362 = vmatpush1.msra.mxu0 %v1350
    %1363 = vmatprep.subr.mxu0 0.0
    %1364 = vmatpush1.msra.mxu0 0.0
    %1365 = vmatprep.subr.mxu0 0.0
    %1366 = vmatpush1.msra.mxu0 0.0
    %1367 = vmatprep.subr.mxu0 0.0
    %1368 = vmatpush1.msra.mxu0 0.0
    %1369 = vmatprep.subr.mxu0 0.0
    %1370 = vmatpush1.msra.mxu0 0.0
    %1371 = vmatprep.subr.mxu0 0.0
    %1372 = vmatpush1.msra.mxu0 0.0
    %1373 = vmatprep.subr.mxu0 0.0
    %1374 = vmatpush1.msra.mxu0 0.0
    %1375 = vmatprep.subr.mxu0 0.0
    %1376 = vmatpush1.msra.mxu0 0.0
    %1377 = vmatprep.subr.mxu0 0.0
    %1378 = vmatpush1.msra.mxu0 0.0
    %1379 = vmatprep.subr.mxu0 0.0
    %1380 = vmatpush1.msra.mxu0 0.0
    %1381 = vmatprep.subr.mxu0 0.0
    %1382 = vmatpush1.msra.mxu0 0.0
    %1383 = vmatprep.subr.mxu0 0.0
    %1384 = vmatpush1.msra.mxu0 0.0
    %1385 = vmatprep.subr.mxu0 0.0
    %1386 = vmatpush1.msra.mxu0 0.0
    %1387 = vmatprep.subr.mxu0 0.0
    %1388 = vmatpush1.msra.mxu0 0.0
    %1389 = vmatprep.subr.mxu0 0.0
    %1390 = vmatpush1.msra.mxu0 0.0
    %1391 = vmatprep.subr.mxu0 0.0
    %1392 = vmatpush1.msra.mxu0 0.0
    %1393 = vmatprep.subr.mxu0 0.0
    %1394 = vmatpush1.msra.mxu0 0.0
    %1395 = vmatprep.subr.mxu0 0.0
    %1396 = vmatpush1.msra.mxu0 0.0
    %1397 = vmatprep.subr.mxu0 0.0
    %1398 = vmatpush1.msra.mxu0 0.0
    %1399 = vmatprep.subr.mxu0 0.0
    %1400 = vmatpush1.msra.mxu0 0.0
    %1401 = vmatprep.subr.mxu0 0.0
    %1402 = vmatpush1.msra.mxu0 0.0
    %1403 = vmatprep.subr.mxu0 0.0
    %1404 = vmatpush1.msra.mxu0 0.0
    %1405 = vmatprep.subr.mxu0 0.0
    %1406 = vmatpush1.msra.mxu0 0.0
    %1407 = vmatprep.subr.mxu0 0.0
    %1408 = vmatpush1.msra.mxu0 0.0
    %1409 = vmatprep.subr.mxu0 0.0
    %1410 = vmatpush1.msra.mxu0 0.0
    %1411 = vmatprep.subr.mxu0 0.0
    %1412 = vmatpush1.msra.mxu0 0.0
    %1413 = vmatprep.subr.mxu0 0.0
    %1414 = vmatpush1.msra.mxu0 0.0
    %1415 = vmatprep.subr.mxu0 0.0
    %1416 = vmatpush1.msra.mxu0 0.0
    %1417 = vmatprep.subr.mxu0 0.0
    %1418 = vmatpush1.msra.mxu0 0.0
    %1419 = vmatprep.subr.mxu0 0.0
    %1420 = vmatpush1.msra.mxu0 0.0
    %1421 = vmatprep.subr.mxu0 0.0
    %1422 = vmatpush1.msra.mxu0 0.0
    %1423 = vmatprep.mubr.f32.mxu0 0.0
    %1424 = vmatmul.mubr.f32.gmra.mrb[0].mxu0 %v1354
    %v1425 = vpop.f32.mrb[0].mxu0
    %v1426 = vadd.f32 0.0, %v1425
    %v1427 = vpop.f32.mrb[0].mxu0
    %1428 = vmatprep.mubr.f32.mxu0 0.0
    %1429 = vmatmul.mubr.f32.gmra.mrb[0].mxu0 %v1357
    %v1430 = vpop.f32.mrb[0].mxu0
    %v1431 = vadd.f32 0.0, %v1430
    %v1432 = vpop.f32.mrb[0].mxu0
    %1433 = vdwg.mxu0
    %v1434 = vrcp.pop %v1341
    %v1435 = vrcp.pop %v1344
    %v1436 = vmul.f32 %v1426, %v1434
    %v1437 = vmul.f32 %v1431, %v1435
    %1440 = vrot.lane.b32.xlu0 %v1436, 32
    %v1441 = vpop.permute.xlu0 %1440
    %1442 = vrot.lane.b32.xlu0 %v1437, 32
    %v1443 = vpop.permute.xlu0 %1442
    %1446 = vst.msk [vmem:[%s1201] sm:$0xff] %vm496, %v1441
    %1447 = vst.msk [vmem:[%s1201 + $0x8] sm:$0xff] %vm496, %v1443
    %v1448 = vld [vmem:[%s989] sm:$0xff]
    %v1449 = vld [vmem:[%s989 + $0x8] sm:$0xff]
    %v1450 = vld [vmem:[%s992] sm:$0xff]
    %v1451 = vld [vmem:[%s992 + $0x8] sm:$0xff]
    %v1452 = vmul.f32 %v1450, %v1450
    %v1453 = vmul.f32 %v1451, %v1451
    %1456 = vrot.lane.b32.xlu0 %v1452, 64
    %v1457 = vpop.permute.xlu0 %1456
    %1458 = vrot.lane.b32.xlu0 %v1453, 64
    %v1459 = vpop.permute.xlu0 %1458
    %v1462 = vsel %vm46, %v1457, 0.0
    %1463 = vadd.xlane.f32.xlu0 %v1462
    %v1464 = vpop.xlane.xlu0 %1463
    %v1465 = vsel %vm46, %v1459, 0.0
    %1466 = vadd.xlane.f32.xlu0 %v1465
    %v1467 = vpop.xlane.xlu0 %1466
    %v1468 = vmax.f32 %v1464, 1e-24
    %v1469 = vmax.f32 %v1467, 1e-24
    %v1470 = vrsqrt.pop %v1468
    %v1471 = vrsqrt.pop %v1469
    %v1472 = vmul.f32 %v1470, 0.17677669
    %v1473 = vmul.f32 %v1471, 0.17677669
    %v1474 = vmul.f32 %v1450, %v1472
    %v1475 = vmul.f32 %v1451, %v1473
    %1478 = vrot.lane.b32.xlu0 %v1448, 64
    %v1479 = vpop.permute.xlu0 %1478
    %1480 = vrot.lane.b32.xlu0 %v1449, 64
    %v1481 = vpop.permute.xlu0 %1480
    %1484 = vrot.lane.b32.xlu0 %v1474, 64
    %v1485 = vpop.permute.xlu0 %1484
    %1486 = vrot.lane.b32.xlu0 %v1475, 64
    %v1487 = vpop.permute.xlu0 %1486
    %v1488 = vsel %vm46, %v1479, 0
    %v1490 = vsel %vm46, %v1481, 0
    %v1492 = vsel %vm46, %v1485, 0
    %v1494 = vsel %vm46, %v1487, 0
    %1496 = vmatprep.subr.mxu0 0.0
    %1497 = vmatpush1.xpose.msra.mxu0 %v1492
    %1498 = vmatprep.subr.mxu0 0.0
    %1499 = vmatpush1.xpose.msra.mxu0 %v1494
    %1500 = vmatprep.subr.mxu0 0.0
    %1501 = vmatpush1.xpose.msra.mxu0 0.0
    %1502 = vmatprep.subr.mxu0 0.0
    %1503 = vmatpush1.xpose.msra.mxu0 0.0
    %1504 = vmatprep.subr.mxu0 0.0
    %1505 = vmatpush1.xpose.msra.mxu0 0.0
    %1506 = vmatprep.subr.mxu0 0.0
    %1507 = vmatpush1.xpose.msra.mxu0 0.0
    %1508 = vmatprep.subr.mxu0 0.0
    %1509 = vmatpush1.xpose.msra.mxu0 0.0
    %1510 = vmatprep.subr.mxu0 0.0
    %1511 = vmatpush1.xpose.msra.mxu0 0.0
    %1512 = vmatprep.subr.mxu0 0.0
    %1513 = vmatpush1.xpose.msra.mxu0 0.0
    %1514 = vmatprep.subr.mxu0 0.0
    %1515 = vmatpush1.xpose.msra.mxu0 0.0
    %1516 = vmatprep.subr.mxu0 0.0
    %1517 = vmatpush1.xpose.msra.mxu0 0.0
    %1518 = vmatprep.subr.mxu0 0.0
    %1519 = vmatpush1.xpose.msra.mxu0 0.0
    %1520 = vmatprep.subr.mxu0 0.0
    %1521 = vmatpush1.xpose.msra.mxu0 0.0
    %1522 = vmatprep.subr.mxu0 0.0
    %1523 = vmatpush1.xpose.msra.mxu0 0.0
    %1524 = vmatprep.subr.mxu0 0.0
    %1525 = vmatpush1.xpose.msra.mxu0 0.0
    %1526 = vmatprep.subr.mxu0 0.0
    %1527 = vmatpush1.xpose.msra.mxu0 0.0
    %1528 = vmatprep.subr.mxu0 0.0
    %1529 = vmatpush1.xpose.msra.mxu0 0.0
    %1530 = vmatprep.subr.mxu0 0.0
    %1531 = vmatpush1.xpose.msra.mxu0 0.0
    %1532 = vmatprep.subr.mxu0 0.0
    %1533 = vmatpush1.xpose.msra.mxu0 0.0
    %1534 = vmatprep.subr.mxu0 0.0
    %1535 = vmatpush1.xpose.msra.mxu0 0.0
    %1536 = vmatprep.subr.mxu0 0.0
    %1537 = vmatpush1.xpose.msra.mxu0 0.0
    %1538 = vmatprep.subr.mxu0 0.0
    %1539 = vmatpush1.xpose.msra.mxu0 0.0
    %1540 = vmatprep.subr.mxu0 0.0
    %1541 = vmatpush1.xpose.msra.mxu0 0.0
    %1542 = vmatprep.subr.mxu0 0.0
    %1543 = vmatpush1.xpose.msra.mxu0 0.0
    %1544 = vmatprep.subr.mxu0 0.0
    %1545 = vmatpush1.xpose.msra.mxu0 0.0
    %1546 = vmatprep.subr.mxu0 0.0
    %1547 = vmatpush1.xpose.msra.mxu0 0.0
    %1548 = vmatprep.subr.mxu0 0.0
    %1549 = vmatpush1.xpose.msra.mxu0 0.0
    %1550 = vmatprep.subr.mxu0 0.0
    %1551 = vmatpush1.xpose.msra.mxu0 0.0
    %1552 = vmatprep.subr.mxu0 0.0
    %1553 = vmatpush1.xpose.msra.mxu0 0.0
    %1554 = vmatprep.subr.mxu0 0.0
    %1555 = vmatpush1.xpose.msra.mxu0 0.0
    %1556 = vmatprep.subr.mxu0 0.0
    %1557 = vmatpush1.xpose.msra.mxu0 0.0
    %1558 = vmatprep.subr.mxu0 0.0
    %1559 = vmatpush1.xpose.msra.mxu0 0.0
    %1560 = vmatprep.mubr.f32.mxu0 0.0
    %1561 = vmatmul.mubr.f32.gmra.mrb[0].mxu0 %v1488
    %v1562 = vpop.f32.mrb[0].mxu0
    %v1563 = vadd.f32 0.0, %v1562
    %v1564 = vpop.f32.mrb[0].mxu0
    %1565 = vmatprep.mubr.f32.mxu0 0.0
    %1566 = vmatmul.mubr.f32.gmra.mrb[0].mxu0 %v1490
    %v1567 = vpop.f32.mrb[0].mxu0
    %v1568 = vadd.f32 0.0, %v1567
    %v1569 = vpop.f32.mrb[0].mxu0
    %1570 = vdwg.mxu0
    %v1571 = vsel %vm148, %v1563, -inf
    %1572 = vmax.xlane.f32.xlu0 %v1571
    %v1573 = vpop.xlane.xlu0 %1572
    %v1574 = vsel %vm148, %v1568, -inf
    %1575 = vmax.xlane.f32.xlu0 %v1574
    %v1576 = vpop.xlane.xlu0 %1575
    %v1577 = vsub.f32 %v1563, %v1573
    %v1578 = vsub.f32 %v1568, %v1576
    %v1579 = vmul.f32 %v1577, 1.442695
    %v1580 = vpow.pop %v1579
    %v1581 = vmul.f32 %v1578, 1.442695
    %v1582 = vpow.pop %v1581
    %v1583 = vsel %vm148, %v1580, 0.0
    %1584 = vadd.xlane.f32.xlu0 %v1583
    %v1585 = vpop.xlane.xlu0 %1584
    %v1586 = vsel %vm148, %v1582, 0.0
    %1587 = vadd.xlane.f32.xlu0 %v1586
    %v1588 = vpop.xlane.xlu0 %1587
    %1591 = vrot.lane.b32.xlu0 %v1450, 64
    %v1592 = vpop.permute.xlu0 %1591
    %1593 = vrot.lane.b32.xlu0 %v1451, 64
    %v1594 = vpop.permute.xlu0 %1593
    %v1598 = vsel %vm148, %v1580, 0
    %v1601 = vsel %vm148, %v1582, 0
    %1603 = vmatprep.subr.mxu0 0.0
    %1604 = vmatpush1.msra.mxu0 %v1592
    %1605 = vmatprep.subr.mxu0 0.0
    %1606 = vmatpush1.msra.mxu0 %v1594
    %1607 = vmatprep.subr.mxu0 0.0
    %1608 = vmatpush1.msra.mxu0 0.0
    %1609 = vmatprep.subr.mxu0 0.0
    %1610 = vmatpush1.msra.mxu0 0.0
    %1611 = vmatprep.subr.mxu0 0.0
    %1612 = vmatpush1.msra.mxu0 0.0
    %1613 = vmatprep.subr.mxu0 0.0
    %1614 = vmatpush1.msra.mxu0 0.0
    %1615 = vmatprep.subr.mxu0 0.0
    %1616 = vmatpush1.msra.mxu0 0.0
    %1617 = vmatprep.subr.mxu0 0.0
    %1618 = vmatpush1.msra.mxu0 0.0
    %1619 = vmatprep.subr.mxu0 0.0
    %1620 = vmatpush1.msra.mxu0 0.0
    %1621 = vmatprep.subr.mxu0 0.0
    %1622 = vmatpush1.msra.mxu0 0.0
    %1623 = vmatprep.subr.mxu0 0.0
    %1624 = vmatpush1.msra.mxu0 0.0
    %1625 = vmatprep.subr.mxu0 0.0
    %1626 = vmatpush1.msra.mxu0 0.0
    %1627 = vmatprep.subr.mxu0 0.0
    %1628 = vmatpush1.msra.mxu0 0.0
    %1629 = vmatprep.subr.mxu0 0.0
    %1630 = vmatpush1.msra.mxu0 0.0
    %1631 = vmatprep.subr.mxu0 0.0
    %1632 = vmatpush1.msra.mxu0 0.0
    %1633 = vmatprep.subr.mxu0 0.0
    %1634 = vmatpush1.msra.mxu0 0.0
    %1635 = vmatprep.subr.mxu0 0.0
    %1636 = vmatpush1.msra.mxu0 0.0
    %1637 = vmatprep.subr.mxu0 0.0
    %1638 = vmatpush1.msra.mxu0 0.0
    %1639 = vmatprep.subr.mxu0 0.0
    %1640 = vmatpush1.msra.mxu0 0.0
    %1641 = vmatprep.subr.mxu0 0.0
    %1642 = vmatpush1.msra.mxu0 0.0
    %1643 = vmatprep.subr.mxu0 0.0
    %1644 = vmatpush1.msra.mxu0 0.0
    %1645 = vmatprep.subr.mxu0 0.0
    %1646 = vmatpush1.msra.mxu0 0.0
    %1647 = vmatprep.subr.mxu0 0.0
    %1648 = vmatpush1.msra.mxu0 0.0
    %1649 = vmatprep.subr.mxu0 0.0
    %1650 = vmatpush1.msra.mxu0 0.0
    %1651 = vmatprep.subr.mxu0 0.0
    %1652 = vmatpush1.msra.mxu0 0.0
    %1653 = vmatprep.subr.mxu0 0.0
    %1654 = vmatpush1.msra.mxu0 0.0
    %1655 = vmatprep.subr.mxu0 0.0
    %1656 = vmatpush1.msra.mxu0 0.0
    %1657 = vmatprep.subr.mxu0 0.0
    %1658 = vmatpush1.msra.mxu0 0.0
    %1659 = vmatprep.subr.mxu0 0.0
    %1660 = vmatpush1.msra.mxu0 0.0
    %1661 = vmatprep.subr.mxu0 0.0
    %1662 = vmatpush1.msra.mxu0 0.0
    %1663 = vmatprep.subr.mxu0 0.0
    %1664 = vmatpush1.msra.mxu0 0.0
    %1665 = vmatprep.subr.mxu0 0.0
    %1666 = vmatpush1.msra.mxu0 0.0
    %1667 = vmatprep.mubr.f32.mxu0 0.0
    %1668 = vmatmul.mubr.f32.gmra.mrb[0].mxu0 %v1598
    %v1669 = vpop.f32.mrb[0].mxu0
    %v1670 = vadd.f32 0.0, %v1669
    %v1671 = vpop.f32.mrb[0].mxu0
    %1672 = vmatprep.mubr.f32.mxu0 0.0
    %1673 = vmatmul.mubr.f32.gmra.mrb[0].mxu0 %v1601
    %v1674 = vpop.f32.mrb[0].mxu0
    %v1675 = vadd.f32 0.0, %v1674
    %v1676 = vpop.f32.mrb[0].mxu0
    %1677 = vdwg.mxu0
    %v1678 = vrcp.pop %v1585
    %v1679 = vrcp.pop %v1588
    %v1680 = vmul.f32 %v1670, %v1678
    %v1681 = vmul.f32 %v1675, %v1679
    %1684 = vrot.lane.b32.xlu0 %v1680, 64
    %v1685 = vpop.permute.xlu0 %1684
    %1686 = vrot.lane.b32.xlu0 %v1681, 64
    %v1687 = vpop.permute.xlu0 %1686
    %1690 = vst.msk [vmem:[%s1201] sm:$0xff] %vm741, %v1685
    %1691 = vst.msk [vmem:[%s1201 + $0x8] sm:$0xff] %vm741, %v1687
    %v1692 = vld [vmem:[%s989] sm:$0xff]
    %v1693 = vld [vmem:[%s989 + $0x8] sm:$0xff]
    %v1694 = vld [vmem:[%s992] sm:$0xff]
    %v1695 = vld [vmem:[%s992 + $0x8] sm:$0xff]
    %v1696 = vmul.f32 %v1694, %v1694
    %v1697 = vmul.f32 %v1695, %v1695
    %1700 = vrot.lane.b32.xlu0 %v1696, 32
    %v1701 = vpop.permute.xlu0 %1700
    %1702 = vrot.lane.b32.xlu0 %v1697, 32
    %v1703 = vpop.permute.xlu0 %1702
    %v1706 = vsel %vm46, %v1701, 0.0
    %1707 = vadd.xlane.f32.xlu0 %v1706
    %v1708 = vpop.xlane.xlu0 %1707
    %v1709 = vsel %vm46, %v1703, 0.0
    %1710 = vadd.xlane.f32.xlu0 %v1709
    %v1711 = vpop.xlane.xlu0 %1710
    %v1712 = vmax.f32 %v1708, 1e-24
    %v1713 = vmax.f32 %v1711, 1e-24
    %v1714 = vrsqrt.pop %v1712
    %v1715 = vrsqrt.pop %v1713
    %v1716 = vmul.f32 %v1714, 0.17677669
    %v1717 = vmul.f32 %v1715, 0.17677669
    %v1718 = vmul.f32 %v1694, %v1716
    %v1719 = vmul.f32 %v1695, %v1717
    %1722 = vrot.lane.b32.xlu0 %v1692, 32
    %v1723 = vpop.permute.xlu0 %1722
    %1724 = vrot.lane.b32.xlu0 %v1693, 32
    %v1725 = vpop.permute.xlu0 %1724
    %1728 = vrot.lane.b32.xlu0 %v1718, 32
    %v1729 = vpop.permute.xlu0 %1728
    %1730 = vrot.lane.b32.xlu0 %v1719, 32
    %v1731 = vpop.permute.xlu0 %1730
    %v1732 = vsel %vm46, %v1723, 0
    %v1734 = vsel %vm46, %v1725, 0
    %v1736 = vsel %vm46, %v1729, 0
    %v1738 = vsel %vm46, %v1731, 0
    %1740 = vmatprep.subr.mxu0 0.0
    %1741 = vmatpush1.xpose.msra.mxu0 %v1736
    %1742 = vmatprep.subr.mxu0 0.0
    %1743 = vmatpush1.xpose.msra.mxu0 %v1738
    %1744 = vmatprep.subr.mxu0 0.0
    %1745 = vmatpush1.xpose.msra.mxu0 0.0
    %1746 = vmatprep.subr.mxu0 0.0
    %1747 = vmatpush1.xpose.msra.mxu0 0.0
    %1748 = vmatprep.subr.mxu0 0.0
    %1749 = vmatpush1.xpose.msra.mxu0 0.0
    %1750 = vmatprep.subr.mxu0 0.0
    %1751 = vmatpush1.xpose.msra.mxu0 0.0
    %1752 = vmatprep.subr.mxu0 0.0
    %1753 = vmatpush1.xpose.msra.mxu0 0.0
    %1754 = vmatprep.subr.mxu0 0.0
    %1755 = vmatpush1.xpose.msra.mxu0 0.0
    %1756 = vmatprep.subr.mxu0 0.0
    %1757 = vmatpush1.xpose.msra.mxu0 0.0
    %1758 = vmatprep.subr.mxu0 0.0
    %1759 = vmatpush1.xpose.msra.mxu0 0.0
    %1760 = vmatprep.subr.mxu0 0.0
    %1761 = vmatpush1.xpose.msra.mxu0 0.0
    %1762 = vmatprep.subr.mxu0 0.0
    %1763 = vmatpush1.xpose.msra.mxu0 0.0
    %1764 = vmatprep.subr.mxu0 0.0
    %1765 = vmatpush1.xpose.msra.mxu0 0.0
    %1766 = vmatprep.subr.mxu0 0.0
    %1767 = vmatpush1.xpose.msra.mxu0 0.0
    %1768 = vmatprep.subr.mxu0 0.0
    %1769 = vmatpush1.xpose.msra.mxu0 0.0
    %1770 = vmatprep.subr.mxu0 0.0
    %1771 = vmatpush1.xpose.msra.mxu0 0.0
    %1772 = vmatprep.subr.mxu0 0.0
    %1773 = vmatpush1.xpose.msra.mxu0 0.0
    %1774 = vmatprep.subr.mxu0 0.0
    %1775 = vmatpush1.xpose.msra.mxu0 0.0
    %1776 = vmatprep.subr.mxu0 0.0
    %1777 = vmatpush1.xpose.msra.mxu0 0.0
    %1778 = vmatprep.subr.mxu0 0.0
    %1779 = vmatpush1.xpose.msra.mxu0 0.0
    %1780 = vmatprep.subr.mxu0 0.0
    %1781 = vmatpush1.xpose.msra.mxu0 0.0
    %1782 = vmatprep.subr.mxu0 0.0
    %1783 = vmatpush1.xpose.msra.mxu0 0.0
    %1784 = vmatprep.subr.mxu0 0.0
    %1785 = vmatpush1.xpose.msra.mxu0 0.0
    %1786 = vmatprep.subr.mxu0 0.0
    %1787 = vmatpush1.xpose.msra.mxu0 0.0
    %1788 = vmatprep.subr.mxu0 0.0
    %1789 = vmatpush1.xpose.msra.mxu0 0.0
    %1790 = vmatprep.subr.mxu0 0.0
    %1791 = vmatpush1.xpose.msra.mxu0 0.0
    %1792 = vmatprep.subr.mxu0 0.0
    %1793 = vmatpush1.xpose.msra.mxu0 0.0
    %1794 = vmatprep.subr.mxu0 0.0
    %1795 = vmatpush1.xpose.msra.mxu0 0.0
    %1796 = vmatprep.subr.mxu0 0.0
    %1797 = vmatpush1.xpose.msra.mxu0 0.0
    %1798 = vmatprep.subr.mxu0 0.0
    %1799 = vmatpush1.xpose.msra.mxu0 0.0
    %1800 = vmatprep.subr.mxu0 0.0
    %1801 = vmatpush1.xpose.msra.mxu0 0.0
    %1802 = vmatprep.subr.mxu0 0.0
    %1803 = vmatpush1.xpose.msra.mxu0 0.0
    %1804 = vmatprep.mubr.f32.mxu0 0.0
    %1805 = vmatmul.mubr.f32.gmra.mrb[0].mxu0 %v1732
    %v1806 = vpop.f32.mrb[0].mxu0
    %v1807 = vadd.f32 0.0, %v1806
    %v1808 = vpop.f32.mrb[0].mxu0
    %1809 = vmatprep.mubr.f32.mxu0 0.0
    %1810 = vmatmul.mubr.f32.gmra.mrb[0].mxu0 %v1734
    %v1811 = vpop.f32.mrb[0].mxu0
    %v1812 = vadd.f32 0.0, %v1811
    %v1813 = vpop.f32.mrb[0].mxu0
    %1814 = vdwg.mxu0
    %v1815 = vsel %vm148, %v1807, -inf
    %1816 = vmax.xlane.f32.xlu0 %v1815
    %v1817 = vpop.xlane.xlu0 %1816
    %v1818 = vsel %vm148, %v1812, -inf
    %1819 = vmax.xlane.f32.xlu0 %v1818
    %v1820 = vpop.xlane.xlu0 %1819
    %v1821 = vsub.f32 %v1807, %v1817
    %v1822 = vsub.f32 %v1812, %v1820
    %v1823 = vmul.f32 %v1821, 1.442695
    %v1824 = vpow.pop %v1823
    %v1825 = vmul.f32 %v1822, 1.442695
    %v1826 = vpow.pop %v1825
    %v1827 = vsel %vm148, %v1824, 0.0
    %1828 = vadd.xlane.f32.xlu0 %v1827
    %v1829 = vpop.xlane.xlu0 %1828
    %v1830 = vsel %vm148, %v1826, 0.0
    %1831 = vadd.xlane.f32.xlu0 %v1830
    %v1832 = vpop.xlane.xlu0 %1831
    %1835 = vrot.lane.b32.xlu0 %v1694, 32
    %v1836 = vpop.permute.xlu0 %1835
    %1837 = vrot.lane.b32.xlu0 %v1695, 32
    %v1838 = vpop.permute.xlu0 %1837
    %v1842 = vsel %vm148, %v1824, 0
    %v1845 = vsel %vm148, %v1826, 0
    %1847 = vmatprep.subr.mxu0 0.0
    %1848 = vmatpush1.msra.mxu0 %v1836
    %1849 = vmatprep.subr.mxu0 0.0
    %1850 = vmatpush1.msra.mxu0 %v1838
    %1851 = vmatprep.subr.mxu0 0.0
    %1852 = vmatpush1.msra.mxu0 0.0
    %1853 = vmatprep.subr.mxu0 0.0
    %1854 = vmatpush1.msra.mxu0 0.0
    %1855 = vmatprep.subr.mxu0 0.0
    %1856 = vmatpush1.msra.mxu0 0.0
    %1857 = vmatprep.subr.mxu0 0.0
    %1858 = vmatpush1.msra.mxu0 0.0
    %1859 = vmatprep.subr.mxu0 0.0
    %1860 = vmatpush1.msra.mxu0 0.0
    %1861 = vmatprep.subr.mxu0 0.0
    %1862 = vmatpush1.msra.mxu0 0.0
    %1863 = vmatprep.subr.mxu0 0.0
    %1864 = vmatpush1.msra.mxu0 0.0
    %1865 = vmatprep.subr.mxu0 0.0
    %1866 = vmatpush1.msra.mxu0 0.0
    %1867 = vmatprep.subr.mxu0 0.0
    %1868 = vmatpush1.msra.mxu0 0.0
    %1869 = vmatprep.subr.mxu0 0.0
    %1870 = vmatpush1.msra.mxu0 0.0
    %1871 = vmatprep.subr.mxu0 0.0
    %1872 = vmatpush1.msra.mxu0 0.0
    %1873 = vmatprep.subr.mxu0 0.0
    %1874 = vmatpush1.msra.mxu0 0.0
    %1875 = vmatprep.subr.mxu0 0.0
    %1876 = vmatpush1.msra.mxu0 0.0
    %1877 = vmatprep.subr.mxu0 0.0
    %1878 = vmatpush1.msra.mxu0 0.0
    %1879 = vmatprep.subr.mxu0 0.0
    %1880 = vmatpush1.msra.mxu0 0.0
    %1881 = vmatprep.subr.mxu0 0.0
    %1882 = vmatpush1.msra.mxu0 0.0
    %1883 = vmatprep.subr.mxu0 0.0
    %1884 = vmatpush1.msra.mxu0 0.0
    %1885 = vmatprep.subr.mxu0 0.0
    %1886 = vmatpush1.msra.mxu0 0.0
    %1887 = vmatprep.subr.mxu0 0.0
    %1888 = vmatpush1.msra.mxu0 0.0
    %1889 = vmatprep.subr.mxu0 0.0
    %1890 = vmatpush1.msra.mxu0 0.0
    %1891 = vmatprep.subr.mxu0 0.0
    %1892 = vmatpush1.msra.mxu0 0.0
    %1893 = vmatprep.subr.mxu0 0.0
    %1894 = vmatpush1.msra.mxu0 0.0
    %1895 = vmatprep.subr.mxu0 0.0
    %1896 = vmatpush1.msra.mxu0 0.0
    %1897 = vmatprep.subr.mxu0 0.0
    %1898 = vmatpush1.msra.mxu0 0.0
    %1899 = vmatprep.subr.mxu0 0.0
    %1900 = vmatpush1.msra.mxu0 0.0
    %1901 = vmatprep.subr.mxu0 0.0
    %1902 = vmatpush1.msra.mxu0 0.0
    %1903 = vmatprep.subr.mxu0 0.0
    %1904 = vmatpush1.msra.mxu0 0.0
    %1905 = vmatprep.subr.mxu0 0.0
    %1906 = vmatpush1.msra.mxu0 0.0
    %1907 = vmatprep.subr.mxu0 0.0
    %1908 = vmatpush1.msra.mxu0 0.0
    %1909 = vmatprep.subr.mxu0 0.0
    %1910 = vmatpush1.msra.mxu0 0.0
    %1911 = vmatprep.mubr.f32.mxu0 0.0
    %1912 = vmatmul.mubr.f32.gmra.mrb[0].mxu0 %v1842
    %v1913 = vpop.f32.mrb[0].mxu0
    %v1914 = vadd.f32 0.0, %v1913
    %v1915 = vpop.f32.mrb[0].mxu0
    %1916 = vmatprep.mubr.f32.mxu0 0.0
    %1917 = vmatmul.mubr.f32.gmra.mrb[0].mxu0 %v1845
    %v1918 = vpop.f32.mrb[0].mxu0
    %v1919 = vadd.f32 0.0, %v1918
    %v1920 = vpop.f32.mrb[0].mxu0
    %1921 = vdwg.mxu0
    %v1922 = vrcp.pop %v1829
    %v1923 = vrcp.pop %v1832
    %v1924 = vmul.f32 %v1914, %v1922
    %v1925 = vmul.f32 %v1919, %v1923
    %1928 = vrot.lane.b32.xlu0 %v1924, 96
    %v1929 = vpop.permute.xlu0 %1928
    %1930 = vrot.lane.b32.xlu0 %v1925, 96
    %v1931 = vpop.permute.xlu0 %1930
    %1934 = vst.msk [vmem:[%s1201] sm:$0xff] %vm986, %v1929
    %1935 = vst.msk [vmem:[%s1201 + $0x8] sm:$0xff] %vm986, %v1931
    // Predicated region
    $region18: #{tpu_custom_call.1} parent=1 // pred_check
      _
    $region19: #{tpu_custom_call.1} parent=1 // pred_check_branch
      %1937 = sbr.rel (0) target = $region21
    $region20: #{tpu_custom_call.1} parent=1 // pred_region
      %s1939 = ssub.s32 512, 512
      %1940 = vsyncadd [#allocation4], %s1939
      %s1941 = sshll.u32 [#allocation7], 4
      %s1942 = int_to_ptr.vmem [resolvable:$true] %s1941
      %1947 = dma.vmem_to_hbm [thread:$0]  %s1942, 512, %s2, [#allocation4], 128, 128, 8
    $region21: #{tpu_custom_call.1} parent=1 // pred_fallthru
      _
    // Predicated region
    $region22: #{tpu_custom_call.1} parent=1 // pred_check
      _
    $region23: #{tpu_custom_call.1} parent=1 // pred_check_branch
      %1949 = sbr.rel (0) target = $region25
    $region24: #{tpu_custom_call.1} parent=1 // pred_region
      %1950 = dma.done [#allocation4], 512
    $region25: #{tpu_custom_call.1} parent=1 // pred_fallthru
      _
    %1951 = vsyncpa [#allocation3], 1
    %1952 = vsyncpa [#allocation6], 1
    %1953 = vsyncpa [#allocation4], 1

</llo_original>
